<compile_context>
chip_gen: v6e
topology: v6e:2x2x1
jax: 0.10.0
libtpu: 0.0.40
codegen_flags: <defaults>
</compile_context>

<pallas_src>
import functools

import jax
import jax.numpy as jnp
import numpy as np
from jax.experimental import pallas as pl
from jax.experimental.pallas import tpu as pltpu

CONFIGS = dict(
    lstm_units=32,            # H (4H = 128 -> one full f32 lane vreg of gates)
    sub_policies=4,           # S
    sub_policy_ops=2,         # ops (output rows are broadcast copies)
    sub_policy_op_priority=5, # P
    sub_policy_op_round=11,   # R
)
SEQ = 8            # A.shape[0] -> LSTM sequence length (batch = 1)
IN_FEATURES = 100  # nn.Linear(100, 1)


def _lstm_policy_kernel(a_ref, w0x_ref, wb_ref, head_ref, *, hidden, seq_len):
    H = hidden
    H4 = 4 * H

    # ---- unpack the packed weight/bias array (static, 8-aligned row slices) ----
    # rows [0,   H)  : w_hh0   (H, 4H)   (i/f/o cols pre-scaled by 0.5)
    # rows [H,  2H)  : w_ih1   (H, 4H)   (pre-scaled)
    # rows [2H, 3H)  : w_hh1   (H, 4H)   (pre-scaled)
    # rows [3H, 4H)  : w_head  (type|prob, zero-padded to 4H lanes)
    # row   4H       : b0x  = (b_line*w_ih0 + b_ih0 + b_hh0)  (pre-scaled)
    # row   4H+1     : b1   = (b_ih1 + b_hh1)                 (pre-scaled)
    # row   4H+2     : b_head (zero-padded)
    w_hh0 = wb_ref[0:H, :]
    w_ih1 = wb_ref[H:2 * H, :]
    w_hh1 = wb_ref[2 * H:3 * H, :]
    w_head = wb_ref[3 * H:4 * H, :]
    b0x = wb_ref[H4:H4 + 1, :]
    b1 = wb_ref[H4 + 1:H4 + 2, :]
    b_head = wb_ref[H4 + 2:H4 + 3, :]

    # ---- layer-0 input projection for ALL timesteps, off the serial chain ----
    # g0x_pre[t] = 0.5-folded( line(A)[t]*w_ih0 + b0 )  ==  A[t] @ w0x + b0x
    # A is zero-padded to K=128 lanes; w0x rows padded to match -> exact result.
    g0x_pre = jnp.dot(a_ref[...], w0x_ref[...],
                      preferred_element_type=jnp.float32) + b0x        # (seq, 4H)

    # ---- one-wide-tanh gate activation ----
    # i/f/o columns arrive pre-scaled by 0.5, so:
    #   sigmoid(x) = 0.5*tanh(0.5*x) + 0.5  ->  tanh(col)*0.5 + 0.5
    #   tanh(x) on the g block (scale 1.0, shift 0.0).
    lane = jax.lax.broadcasted_iota(jnp.int32, (1, H4), 1)
    is_g = (lane >= 2 * H) & (lane < 3 * H)           # tanh gate block
    gscale = jnp.where(is_g, 1.0, 0.5)
    gshift = jnp.where(is_g, 0.0, 0.5)

    def act_gates(gates):
        return jnp.tanh(gates) * gscale + gshift       # [i | f | g | o]

    def split(act):
        return (act[:, 0 * H:1 * H], act[:, 1 * H:2 * H],
                act[:, 2 * H:3 * H], act[:, 3 * H:4 * H])

    # ---- peeled t = 0 (all states are zero) ----
    a0 = act_gates(g0x_pre[0:1, :])
    i0, _, gg0, o0 = split(a0)
    c0 = i0 * gg0                                       # f * 0 dropped
    h0 = o0 * jnp.tanh(c0)

    a1 = act_gates(jnp.dot(h0, w_ih1, preferred_element_type=jnp.float32) + b1)
    i1, _, gg1, o1 = split(a1)
    c1 = i1 * gg1
    h1 = o1 * jnp.tanh(c1)

    # ---- remaining steps (static unroll: full LLO scheduling visibility) ----
    for t in range(1, seq_len):
        g0 = g0x_pre[t:t + 1, :] + jnp.dot(h0, w_hh0,
                                           preferred_element_type=jnp.float32)
        a0 = act_gates(g0)
        i0, f0, gg0, o0 = split(a0)
        c0 = f0 * c0 + i0 * gg0
        h0 = o0 * jnp.tanh(c0)

        # un-fused layer-1: h1 term does not depend on this step's h0.
        g1 = (jnp.dot(h0, w_ih1, preferred_element_type=jnp.float32)
              + jnp.dot(h1, w_hh1, preferred_element_type=jnp.float32)
              + b1)
        a1 = act_gates(g1)
        i1, f1, gg1, o1 = split(a1)
        c1 = f1 * c1 + i1 * gg1
        h1 = o1 * jnp.tanh(c1)

    # ---- fused output heads: [type | prob | 0-pad] -> single (1,128) store ----
    head_ref[...] = (jnp.dot(h1, w_head, preferred_element_type=jnp.float32)
                     + b_head)


@functools.partial(jax.jit, static_argnames=("H", "S", "P", "R", "ops", "seq"))
def _forward_jit(A, w0x, wb, *, H, S, P, R, ops, seq):
    # Pad the contraction dim of A to match the pre-padded w0x (100 -> 128).
    k_pad = w0x.shape[0]
    if A.shape[1] != k_pad:
        A = jnp.pad(A, ((0, 0), (0, k_pad - A.shape[1])))

    kernel = functools.partial(_lstm_policy_kernel, hidden=H, seq_len=seq)
    vmem = pl.BlockSpec(memory_space=pltpu.MemorySpace.VMEM)

    head = pl.pallas_call(
        kernel,
        out_shape=jax.ShapeDtypeStruct((1, 4 * H), jnp.float32),
        in_specs=[vmem, vmem, vmem],
        out_specs=vmem,
    )(A, w0x, wb)

    type_flat = head[:, :S * P]
    prob_flat = head[:, S * P:S * (P + R)]
    # Glue: op_type_outputs[i][0] = head_i(xx) broadcast over sub_policy_ops rows.
    op_type = jnp.broadcast_to(type_flat.reshape(S, 1, 1, P), (S, 1, ops, P))
    op_prob = jnp.broadcast_to(prob_flat.reshape(S, 1, 1, R), (S, 1, ops, R))
    return op_type, op_prob


def lstm_policy_forward(A, packed, configs):
    return _forward_jit(
        A, packed['w0x'], packed['wb'],
        H=configs['lstm_units'], S=configs['sub_policies'],
        P=configs['sub_policy_op_priority'], R=configs['sub_policy_op_round'],
        ops=configs['sub_policy_ops'], seq=A.shape[0])


def init_params(key, configs, in_features):
    """Torch-layout parameters, pre-transposed to (in, 4H)/(H, 4H)."""
    H = configs['lstm_units']
    S = configs['sub_policies']
    P = configs['sub_policy_op_priority']
    R = configs['sub_policy_op_round']
    keys = jax.random.split(key, 12)
    u = lambda k, shape, s=0.1: jax.random.uniform(k, shape, jnp.float32, -s, s)
    return dict(
        w_line=u(keys[0], (in_features, 1)),
        b_line=u(keys[1], (1, 1)),
        w_ih0=u(keys[2], (1, 4 * H)),      # layer0 weight_ih (4H,1) transposed
        w_hh0=u(keys[3], (H, 4 * H)),      # layer0 weight_hh (4H,H) transposed
        b0=u(keys[4], (1, 4 * H)),         # b_ih_l0 + b_hh_l0 folded
        w_ih1=u(keys[5], (H, 4 * H)),
        w_hh1=u(keys[6], (H, 4 * H)),
        b1=u(keys[7], (1, 4 * H)),
        w_type=u(keys[8], (H, S * P)),     # S stacked Linear(H, P) heads
        b_type=u(keys[9], (1, S * P)),
        w_prob=u(keys[10], (H, S * R)),    # S stacked Linear(H, R) heads
        b_prob=u(keys[11], (1, S * R)),
    )


def pack_params(raw, configs, in_features):
    """Fold/fuse/scale/pad raw parameters into the kernel's 2 packed arrays."""
    H = configs['lstm_units']
    S = configs['sub_policies']
    P = configs['sub_policy_op_priority']
    R = configs['sub_policy_op_round']
    H4 = 4 * H
    assert S * (P + R) <= H4, "fused head must fit in 4H lanes"

    # 0.5 sigmoid pre-scale folded into the i/f/o gate columns of all gate
    # weights & biases (kernel then only does tanh(gates)*gscale + gshift).
    col = jnp.arange(H4)
    is_g = (col >= 2 * H) & (col < 3 * H)
    gate_scale = jnp.where(is_g, 1.0, 0.5).astype(jnp.float32)[None, :]  # (1,4H)

    # line Linear folded into layer-0 input weights.
    w0x = (raw['w_line'] @ raw['w_ih0']) * gate_scale                # (100, 4H)
    b0x = (raw['b_line'] * raw['w_ih0'] + raw['b0']) * gate_scale    # (1, 4H)

    # Contraction-dim zero-pad 100 -> 128 for a lane-aligned MXU pass.
    k_pad = ((in_features + 127) // 128) * 128
    w0x = jnp.pad(w0x, ((0, k_pad - in_features), (0, 0)))           # (128, 4H)

    w_hh0 = raw['w_hh0'] * gate_scale
    w_ih1 = raw['w_ih1'] * gate_scale
    w_hh1 = raw['w_hh1'] * gate_scale
    b1 = raw['b1'] * gate_scale

    # heads: [type | prob], zero-padded to 128 lanes for an unmasked store.
    w_head = jnp.concatenate([raw['w_type'], raw['w_prob']], axis=1)
    b_head = jnp.concatenate([raw['b_type'], raw['b_prob']], axis=1)
    w_head = jnp.pad(w_head, ((0, 0), (0, H4 - w_head.shape[1])))
    b_head = jnp.pad(b_head, ((0, 0), (0, H4 - b_head.shape[1])))

    wb = jnp.concatenate([
        w_hh0,                                # rows [0,  H)
        w_ih1,                                # rows [H,  2H)
        w_hh1,                                # rows [2H, 3H)
        w_head,                               # rows [3H, 4H)
        b0x,                                  # row 4H
        b1,                                   # row 4H+1
        b_head,                               # row 4H+2
        jnp.zeros((5, H4), jnp.float32),      # pad rows -> multiple of 8
    ], axis=0)                                # (4H + 8, 4H)
    return dict(w0x=w0x, wb=wb)


def reference_forward(A, raw, configs):
    """Pure-JAX reference with torch.nn.LSTM semantics (correctness check)."""
    H = configs['lstm_units']
    S = configs['sub_policies']
    P = configs['sub_policy_op_priority']
    R = configs['sub_policy_op_round']
    ops = configs['sub_policy_ops']

    x = A @ raw['w_line'] + raw['b_line']
    h0 = c0 = h1 = c1 = jnp.zeros((1, H), jnp.float32)

    def cell(g, c):
        i = jax.nn.sigmoid(g[:, :H])
        f = jax.nn.sigmoid(g[:, H:2 * H])
        gg = jnp.tanh(g[:, 2 * H:3 * H])
        o = jax.nn.sigmoid(g[:, 3 * H:])
        c = f * c + i * gg
        return o * jnp.tanh(c), c

    for t in range(A.shape[0]):
        x_t = x[t:t + 1, :]
        g0 = x_t * raw['w_ih0'] + h0 @ raw['w_hh0'] + raw['b0']
        h0, c0 = cell(g0, c0)
        g1 = h0 @ raw['w_ih1'] + h1 @ raw['w_hh1'] + raw['b1']
        h1, c1 = cell(g1, c1)

    type_flat = h1 @ raw['w_type'] + raw['b_type']
    prob_flat = h1 @ raw['w_prob'] + raw['b_prob']
    op_type = jnp.broadcast_to(type_flat.reshape(S, 1, 1, P), (S, 1, ops, P))
    op_prob = jnp.broadcast_to(prob_flat.reshape(S, 1, 1, R), (S, 1, ops, R))
    return op_type, op_prob


if __name__ == "__main__":
    key = jax.random.PRNGKey(0)
    k_a, k_p = jax.random.split(key)
    A = jax.random.normal(k_a, (SEQ, IN_FEATURES), jnp.float32)
    raw = init_params(k_p, CONFIGS, IN_FEATURES)
    packed = jax.tree.map(jax.block_until_ready,
                          pack_params(raw, CONFIGS, IN_FEATURES))

    op_type, op_prob = lstm_policy_forward(A, packed, CONFIGS)
    jax.block_until_ready((op_type, op_prob))

    S = CONFIGS['sub_policies']
    ops = CONFIGS['sub_policy_ops']
    assert op_type.shape == (S, 1, ops, CONFIGS['sub_policy_op_priority'])
    assert op_prob.shape == (S, 1, ops, CONFIGS['sub_policy_op_round'])

    ref_type, ref_prob = reference_forward(A, raw, CONFIGS)
    np.testing.assert_allclose(np.asarray(op_type), np.asarray(ref_type),
                               rtol=1e-3, atol=1e-3)
    np.testing.assert_allclose(np.asarray(op_prob), np.asarray(ref_prob),
                               rtol=1e-3, atol=1e-3)
    print("KERNEL_OK")
</pallas_src>

<mosaic_0001>
module attributes {stable_mosaic.version = 11 : i64} {
  func.func @_lstm_policy_kernel(%arg0: memref<8x128xf32, #tpu.memory_space<vmem>>, %arg1: memref<128x128xf32, #tpu.memory_space<vmem>>, %arg2: memref<136x128xf32, #tpu.memory_space<vmem>>, %arg3: memref<1x128xf32, #tpu.memory_space<vmem>>) attributes {dimension_semantics = [], scalar_prefetch = 0 : i64, scratch_operands = 0 : i64, tpu.core_type = #tpu.core_type<tc>} {
    %c0 = arith.constant 0 : index
    %c0_0 = arith.constant 0 : index
    %0 = vector.load %arg2[%c0, %c0_0] : memref<136x128xf32, #tpu.memory_space<vmem>>, vector<32x128xf32>
    %c32 = arith.constant 32 : index
    %c0_1 = arith.constant 0 : index
    %1 = vector.load %arg2[%c32, %c0_1] : memref<136x128xf32, #tpu.memory_space<vmem>>, vector<32x128xf32>
    %c64 = arith.constant 64 : index
    %c0_2 = arith.constant 0 : index
    %2 = vector.load %arg2[%c64, %c0_2] : memref<136x128xf32, #tpu.memory_space<vmem>>, vector<32x128xf32>
    %c96 = arith.constant 96 : index
    %c0_3 = arith.constant 0 : index
    %3 = vector.load %arg2[%c96, %c0_3] : memref<136x128xf32, #tpu.memory_space<vmem>>, vector<32x128xf32>
    %c128 = arith.constant 128 : index
    %c0_4 = arith.constant 0 : index
    %4 = vector.load %arg2[%c128, %c0_4] : memref<136x128xf32, #tpu.memory_space<vmem>>, vector<1x128xf32>
    %c129 = arith.constant 129 : index
    %c0_5 = arith.constant 0 : index
    %5 = vector.load %arg2[%c129, %c0_5] : memref<136x128xf32, #tpu.memory_space<vmem>>, vector<1x128xf32>
    %c130 = arith.constant 130 : index
    %c0_6 = arith.constant 0 : index
    %6 = vector.load %arg2[%c130, %c0_6] : memref<136x128xf32, #tpu.memory_space<vmem>>, vector<1x128xf32>
    %c0_7 = arith.constant 0 : index
    %c0_8 = arith.constant 0 : index
    %7 = vector.load %arg0[%c0_7, %c0_8] : memref<8x128xf32, #tpu.memory_space<vmem>>, vector<8x128xf32>
    %c0_9 = arith.constant 0 : index
    %c0_10 = arith.constant 0 : index
    %8 = vector.load %arg1[%c0_9, %c0_10] : memref<128x128xf32, #tpu.memory_space<vmem>>, vector<128x128xf32>
    %cst = arith.constant dense<0.000000e+00> : vector<8x128xf32>
    %9 = tpu.matmul %7, %8, %cst {dimension_numbers = #tpu.dot_dimension_numbers<[1], [0], [0], [1], [0, 0, 1, 1], [], []>} : vector<8x128xf32>, vector<128x128xf32>, vector<8x128xf32> -> vector<8x128xf32>
    %10 = vector.broadcast %4 : vector<1x128xf32> to vector<8x128xf32>
    %11 = arith.addf %9, %10 : vector<8x128xf32>
    %12 = tpu.iota {dimensions = array<i32: 1>} : vector<1x128xi32>
    %c64_i32 = arith.constant 64 : i32
    %13 = vector.broadcast %c64_i32 : i32 to vector<1x128xi32>
    %14 = arith.cmpi sge, %12, %13 : vector<1x128xi32>
    %c96_i32 = arith.constant 96 : i32
    %15 = vector.broadcast %c96_i32 : i32 to vector<1x128xi32>
    %16 = arith.cmpi slt, %12, %15 : vector<1x128xi32>
    %17 = arith.andi %14, %16 : vector<1x128xi1>
    %cst_11 = arith.constant 1.000000e+00 : f32
    %cst_12 = arith.constant 5.000000e-01 : f32
    %18 = vector.broadcast %cst_11 : f32 to vector<1x128xf32>
    %19 = vector.broadcast %cst_12 : f32 to vector<1x128xf32>
    %20 = arith.select %17, %18, %19 : vector<1x128xi1>, vector<1x128xf32>
    %cst_13 = arith.constant 0.000000e+00 : f32
    %cst_14 = arith.constant 5.000000e-01 : f32
    %21 = vector.broadcast %cst_13 : f32 to vector<1x128xf32>
    %22 = vector.broadcast %cst_14 : f32 to vector<1x128xf32>
    %23 = arith.select %17, %21, %22 : vector<1x128xi1>, vector<1x128xf32>
    %24 = vector.extract_strided_slice %11 {offsets = [0, 0], sizes = [1, 128], strides = [1, 1]} : vector<8x128xf32> to vector<1x128xf32>
    %25 = math.tanh %24 : vector<1x128xf32>
    %26 = arith.mulf %25, %20 : vector<1x128xf32>
    %27 = arith.addf %26, %23 : vector<1x128xf32>
    %28 = vector.extract_strided_slice %27 {offsets = [0, 0], sizes = [1, 32], strides = [1, 1]} : vector<1x128xf32> to vector<1x32xf32>
    %29 = vector.extract_strided_slice %27 {offsets = [0, 64], sizes = [1, 32], strides = [1, 1]} : vector<1x128xf32> to vector<1x32xf32>
    %30 = vector.extract_strided_slice %27 {offsets = [0, 96], sizes = [1, 32], strides = [1, 1]} : vector<1x128xf32> to vector<1x32xf32>
    %31 = arith.mulf %28, %29 : vector<1x32xf32>
    %32 = math.tanh %31 : vector<1x32xf32>
    %33 = arith.mulf %30, %32 : vector<1x32xf32>
    %cst_15 = arith.constant dense<0.000000e+00> : vector<1x128xf32>
    %34 = tpu.matmul %33, %1, %cst_15 {dimension_numbers = #tpu.dot_dimension_numbers<[1], [0], [0], [1], [0, 0, 1, 1], [], []>} : vector<1x32xf32>, vector<32x128xf32>, vector<1x128xf32> -> vector<1x128xf32>
    %35 = arith.addf %34, %5 : vector<1x128xf32>
    %36 = math.tanh %35 : vector<1x128xf32>
    %37 = arith.mulf %36, %20 : vector<1x128xf32>
    %38 = arith.addf %37, %23 : vector<1x128xf32>
    %39 = vector.extract_strided_slice %38 {offsets = [0, 0], sizes = [1, 32], strides = [1, 1]} : vector<1x128xf32> to vector<1x32xf32>
    %40 = vector.extract_strided_slice %38 {offsets = [0, 64], sizes = [1, 32], strides = [1, 1]} : vector<1x128xf32> to vector<1x32xf32>
    %41 = vector.extract_strided_slice %38 {offsets = [0, 96], sizes = [1, 32], strides = [1, 1]} : vector<1x128xf32> to vector<1x32xf32>
    %42 = arith.mulf %39, %40 : vector<1x32xf32>
    %43 = math.tanh %42 : vector<1x32xf32>
    %44 = arith.mulf %41, %43 : vector<1x32xf32>
    %45 = vector.extract_strided_slice %11 {offsets = [1, 0], sizes = [1, 128], strides = [1, 1]} : vector<8x128xf32> to vector<1x128xf32>
    %cst_16 = arith.constant dense<0.000000e+00> : vector<1x128xf32>
    %46 = tpu.matmul %33, %0, %cst_16 {dimension_numbers = #tpu.dot_dimension_numbers<[1], [0], [0], [1], [0, 0, 1, 1], [], []>} : vector<1x32xf32>, vector<32x128xf32>, vector<1x128xf32> -> vector<1x128xf32>
    %47 = arith.addf %45, %46 : vector<1x128xf32>
    %48 = math.tanh %47 : vector<1x128xf32>
    %49 = arith.mulf %48, %20 : vector<1x128xf32>
    %50 = arith.addf %49, %23 : vector<1x128xf32>
    %51 = vector.extract_strided_slice %50 {offsets = [0, 0], sizes = [1, 32], strides = [1, 1]} : vector<1x128xf32> to vector<1x32xf32>
    %52 = vector.extract_strided_slice %50 {offsets = [0, 32], sizes = [1, 32], strides = [1, 1]} : vector<1x128xf32> to vector<1x32xf32>
    %53 = vector.extract_strided_slice %50 {offsets = [0, 64], sizes = [1, 32], strides = [1, 1]} : vector<1x128xf32> to vector<1x32xf32>
    %54 = vector.extract_strided_slice %50 {offsets = [0, 96], sizes = [1, 32], strides = [1, 1]} : vector<1x128xf32> to vector<1x32xf32>
    %55 = arith.mulf %52, %31 : vector<1x32xf32>
    %56 = arith.mulf %51, %53 : vector<1x32xf32>
    %57 = arith.addf %55, %56 : vector<1x32xf32>
    %58 = math.tanh %57 : vector<1x32xf32>
    %59 = arith.mulf %54, %58 : vector<1x32xf32>
    %cst_17 = arith.constant dense<0.000000e+00> : vector<1x128xf32>
    %60 = tpu.matmul %59, %1, %cst_17 {dimension_numbers = #tpu.dot_dimension_numbers<[1], [0], [0], [1], [0, 0, 1, 1], [], []>} : vector<1x32xf32>, vector<32x128xf32>, vector<1x128xf32> -> vector<1x128xf32>
    %cst_18 = arith.constant dense<0.000000e+00> : vector<1x128xf32>
    %61 = tpu.matmul %44, %2, %cst_18 {dimension_numbers = #tpu.dot_dimension_numbers<[1], [0], [0], [1], [0, 0, 1, 1], [], []>} : vector<1x32xf32>, vector<32x128xf32>, vector<1x128xf32> -> vector<1x128xf32>
    %62 = arith.addf %60, %61 : vector<1x128xf32>
    %63 = arith.addf %62, %5 : vector<1x128xf32>
    %64 = math.tanh %63 : vector<1x128xf32>
    %65 = arith.mulf %64, %20 : vector<1x128xf32>
    %66 = arith.addf %65, %23 : vector<1x128xf32>
    %67 = vector.extract_strided_slice %66 {offsets = [0, 0], sizes = [1, 32], strides = [1, 1]} : vector<1x128xf32> to vector<1x32xf32>
    %68 = vector.extract_strided_slice %66 {offsets = [0, 32], sizes = [1, 32], strides = [1, 1]} : vector<1x128xf32> to vector<1x32xf32>
    %69 = vector.extract_strided_slice %66 {offsets = [0, 64], sizes = [1, 32], strides = [1, 1]} : vector<1x128xf32> to vector<1x32xf32>
    %70 = vector.extract_strided_slice %66 {offsets = [0, 96], sizes = [1, 32], strides = [1, 1]} : vector<1x128xf32> to vector<1x32xf32>
    %71 = arith.mulf %68, %42 : vector<1x32xf32>
    %72 = arith.mulf %67, %69 : vector<1x32xf32>
    %73 = arith.addf %71, %72 : vector<1x32xf32>
    %74 = math.tanh %73 : vector<1x32xf32>
    %75 = arith.mulf %70, %74 : vector<1x32xf32>
    %76 = vector.extract_strided_slice %11 {offsets = [2, 0], sizes = [1, 128], strides = [1, 1]} : vector<8x128xf32> to vector<1x128xf32>
    %cst_19 = arith.constant dense<0.000000e+00> : vector<1x128xf32>
    %77 = tpu.matmul %59, %0, %cst_19 {dimension_numbers = #tpu.dot_dimension_numbers<[1], [0], [0], [1], [0, 0, 1, 1], [], []>} : vector<1x32xf32>, vector<32x128xf32>, vector<1x128xf32> -> vector<1x128xf32>
    %78 = arith.addf %76, %77 : vector<1x128xf32>
    %79 = math.tanh %78 : vector<1x128xf32>
    %80 = arith.mulf %79, %20 : vector<1x128xf32>
    %81 = arith.addf %80, %23 : vector<1x128xf32>
    %82 = vector.extract_strided_slice %81 {offsets = [0, 0], sizes = [1, 32], strides = [1, 1]} : vector<1x128xf32> to vector<1x32xf32>
    %83 = vector.extract_strided_slice %81 {offsets = [0, 32], sizes = [1, 32], strides = [1, 1]} : vector<1x128xf32> to vector<1x32xf32>
    %84 = vector.extract_strided_slice %81 {offsets = [0, 64], sizes = [1, 32], strides = [1, 1]} : vector<1x128xf32> to vector<1x32xf32>
    %85 = vector.extract_strided_slice %81 {offsets = [0, 96], sizes = [1, 32], strides = [1, 1]} : vector<1x128xf32> to vector<1x32xf32>
    %86 = arith.mulf %83, %57 : vector<1x32xf32>
    %87 = arith.mulf %82, %84 : vector<1x32xf32>
    %88 = arith.addf %86, %87 : vector<1x32xf32>
    %89 = math.tanh %88 : vector<1x32xf32>
    %90 = arith.mulf %85, %89 : vector<1x32xf32>
    %cst_20 = arith.constant dense<0.000000e+00> : vector<1x128xf32>
    %91 = tpu.matmul %90, %1, %cst_20 {dimension_numbers = #tpu.dot_dimension_numbers<[1], [0], [0], [1], [0, 0, 1, 1], [], []>} : vector<1x32xf32>, vector<32x128xf32>, vector<1x128xf32> -> vector<1x128xf32>
    %cst_21 = arith.constant dense<0.000000e+00> : vector<1x128xf32>
    %92 = tpu.matmul %75, %2, %cst_21 {dimension_numbers = #tpu.dot_dimension_numbers<[1], [0], [0], [1], [0, 0, 1, 1], [], []>} : vector<1x32xf32>, vector<32x128xf32>, vector<1x128xf32> -> vector<1x128xf32>
    %93 = arith.addf %91, %92 : vector<1x128xf32>
    %94 = arith.addf %93, %5 : vector<1x128xf32>
    %95 = math.tanh %94 : vector<1x128xf32>
    %96 = arith.mulf %95, %20 : vector<1x128xf32>
    %97 = arith.addf %96, %23 : vector<1x128xf32>
    %98 = vector.extract_strided_slice %97 {offsets = [0, 0], sizes = [1, 32], strides = [1, 1]} : vector<1x128xf32> to vector<1x32xf32>
    %99 = vector.extract_strided_slice %97 {offsets = [0, 32], sizes = [1, 32], strides = [1, 1]} : vector<1x128xf32> to vector<1x32xf32>
    %100 = vector.extract_strided_slice %97 {offsets = [0, 64], sizes = [1, 32], strides = [1, 1]} : vector<1x128xf32> to vector<1x32xf32>
    %101 = vector.extract_strided_slice %97 {offsets = [0, 96], sizes = [1, 32], strides = [1, 1]} : vector<1x128xf32> to vector<1x32xf32>
    %102 = arith.mulf %99, %73 : vector<1x32xf32>
    %103 = arith.mulf %98, %100 : vector<1x32xf32>
    %104 = arith.addf %102, %103 : vector<1x32xf32>
    %105 = math.tanh %104 : vector<1x32xf32>
    %106 = arith.mulf %101, %105 : vector<1x32xf32>
    %107 = vector.extract_strided_slice %11 {offsets = [3, 0], sizes = [1, 128], strides = [1, 1]} : vector<8x128xf32> to vector<1x128xf32>
    %cst_22 = arith.constant dense<0.000000e+00> : vector<1x128xf32>
    %108 = tpu.matmul %90, %0, %cst_22 {dimension_numbers = #tpu.dot_dimension_numbers<[1], [0], [0], [1], [0, 0, 1, 1], [], []>} : vector<1x32xf32>, vector<32x128xf32>, vector<1x128xf32> -> vector<1x128xf32>
    %109 = arith.addf %107, %108 : vector<1x128xf32>
    %110 = math.tanh %109 : vector<1x128xf32>
    %111 = arith.mulf %110, %20 : vector<1x128xf32>
    %112 = arith.addf %111, %23 : vector<1x128xf32>
    %113 = vector.extract_strided_slice %112 {offsets = [0, 0], sizes = [1, 32], strides = [1, 1]} : vector<1x128xf32> to vector<1x32xf32>
    %114 = vector.extract_strided_slice %112 {offsets = [0, 32], sizes = [1, 32], strides = [1, 1]} : vector<1x128xf32> to vector<1x32xf32>
    %115 = vector.extract_strided_slice %112 {offsets = [0, 64], sizes = [1, 32], strides = [1, 1]} : vector<1x128xf32> to vector<1x32xf32>
    %116 = vector.extract_strided_slice %112 {offsets = [0, 96], sizes = [1, 32], strides = [1, 1]} : vector<1x128xf32> to vector<1x32xf32>
    %117 = arith.mulf %114, %88 : vector<1x32xf32>
    %118 = arith.mulf %113, %115 : vector<1x32xf32>
    %119 = arith.addf %117, %118 : vector<1x32xf32>
    %120 = math.tanh %119 : vector<1x32xf32>
    %121 = arith.mulf %116, %120 : vector<1x32xf32>
    %cst_23 = arith.constant dense<0.000000e+00> : vector<1x128xf32>
    %122 = tpu.matmul %121, %1, %cst_23 {dimension_numbers = #tpu.dot_dimension_numbers<[1], [0], [0], [1], [0, 0, 1, 1], [], []>} : vector<1x32xf32>, vector<32x128xf32>, vector<1x128xf32> -> vector<1x128xf32>
    %cst_24 = arith.constant dense<0.000000e+00> : vector<1x128xf32>
    %123 = tpu.matmul %106, %2, %cst_24 {dimension_numbers = #tpu.dot_dimension_numbers<[1], [0], [0], [1], [0, 0, 1, 1], [], []>} : vector<1x32xf32>, vector<32x128xf32>, vector<1x128xf32> -> vector<1x128xf32>
    %124 = arith.addf %122, %123 : vector<1x128xf32>
    %125 = arith.addf %124, %5 : vector<1x128xf32>
    %126 = math.tanh %125 : vector<1x128xf32>
    %127 = arith.mulf %126, %20 : vector<1x128xf32>
    %128 = arith.addf %127, %23 : vector<1x128xf32>
    %129 = vector.extract_strided_slice %128 {offsets = [0, 0], sizes = [1, 32], strides = [1, 1]} : vector<1x128xf32> to vector<1x32xf32>
    %130 = vector.extract_strided_slice %128 {offsets = [0, 32], sizes = [1, 32], strides = [1, 1]} : vector<1x128xf32> to vector<1x32xf32>
    %131 = vector.extract_strided_slice %128 {offsets = [0, 64], sizes = [1, 32], strides = [1, 1]} : vector<1x128xf32> to vector<1x32xf32>
    %132 = vector.extract_strided_slice %128 {offsets = [0, 96], sizes = [1, 32], strides = [1, 1]} : vector<1x128xf32> to vector<1x32xf32>
    %133 = arith.mulf %130, %104 : vector<1x32xf32>
    %134 = arith.mulf %129, %131 : vector<1x32xf32>
    %135 = arith.addf %133, %134 : vector<1x32xf32>
    %136 = math.tanh %135 : vector<1x32xf32>
    %137 = arith.mulf %132, %136 : vector<1x32xf32>
    %138 = vector.extract_strided_slice %11 {offsets = [4, 0], sizes = [1, 128], strides = [1, 1]} : vector<8x128xf32> to vector<1x128xf32>
    %cst_25 = arith.constant dense<0.000000e+00> : vector<1x128xf32>
    %139 = tpu.matmul %121, %0, %cst_25 {dimension_numbers = #tpu.dot_dimension_numbers<[1], [0], [0], [1], [0, 0, 1, 1], [], []>} : vector<1x32xf32>, vector<32x128xf32>, vector<1x128xf32> -> vector<1x128xf32>
    %140 = arith.addf %138, %139 : vector<1x128xf32>
    %141 = math.tanh %140 : vector<1x128xf32>
    %142 = arith.mulf %141, %20 : vector<1x128xf32>
    %143 = arith.addf %142, %23 : vector<1x128xf32>
    %144 = vector.extract_strided_slice %143 {offsets = [0, 0], sizes = [1, 32], strides = [1, 1]} : vector<1x128xf32> to vector<1x32xf32>
    %145 = vector.extract_strided_slice %143 {offsets = [0, 32], sizes = [1, 32], strides = [1, 1]} : vector<1x128xf32> to vector<1x32xf32>
    %146 = vector.extract_strided_slice %143 {offsets = [0, 64], sizes = [1, 32], strides = [1, 1]} : vector<1x128xf32> to vector<1x32xf32>
    %147 = vector.extract_strided_slice %143 {offsets = [0, 96], sizes = [1, 32], strides = [1, 1]} : vector<1x128xf32> to vector<1x32xf32>
    %148 = arith.mulf %145, %119 : vector<1x32xf32>
    %149 = arith.mulf %144, %146 : vector<1x32xf32>
    %150 = arith.addf %148, %149 : vector<1x32xf32>
    %151 = math.tanh %150 : vector<1x32xf32>
    %152 = arith.mulf %147, %151 : vector<1x32xf32>
    %cst_26 = arith.constant dense<0.000000e+00> : vector<1x128xf32>
    %153 = tpu.matmul %152, %1, %cst_26 {dimension_numbers = #tpu.dot_dimension_numbers<[1], [0], [0], [1], [0, 0, 1, 1], [], []>} : vector<1x32xf32>, vector<32x128xf32>, vector<1x128xf32> -> vector<1x128xf32>
    %cst_27 = arith.constant dense<0.000000e+00> : vector<1x128xf32>
    %154 = tpu.matmul %137, %2, %cst_27 {dimension_numbers = #tpu.dot_dimension_numbers<[1], [0], [0], [1], [0, 0, 1, 1], [], []>} : vector<1x32xf32>, vector<32x128xf32>, vector<1x128xf32> -> vector<1x128xf32>
    %155 = arith.addf %153, %154 : vector<1x128xf32>
    %156 = arith.addf %155, %5 : vector<1x128xf32>
    %157 = math.tanh %156 : vector<1x128xf32>
    %158 = arith.mulf %157, %20 : vector<1x128xf32>
    %159 = arith.addf %158, %23 : vector<1x128xf32>
    %160 = vector.extract_strided_slice %159 {offsets = [0, 0], sizes = [1, 32], strides = [1, 1]} : vector<1x128xf32> to vector<1x32xf32>
    %161 = vector.extract_strided_slice %159 {offsets = [0, 32], sizes = [1, 32], strides = [1, 1]} : vector<1x128xf32> to vector<1x32xf32>
    %162 = vector.extract_strided_slice %159 {offsets = [0, 64], sizes = [1, 32], strides = [1, 1]} : vector<1x128xf32> to vector<1x32xf32>
    %163 = vector.extract_strided_slice %159 {offsets = [0, 96], sizes = [1, 32], strides = [1, 1]} : vector<1x128xf32> to vector<1x32xf32>
    %164 = arith.mulf %161, %135 : vector<1x32xf32>
    %165 = arith.mulf %160, %162 : vector<1x32xf32>
    %166 = arith.addf %164, %165 : vector<1x32xf32>
    %167 = math.tanh %166 : vector<1x32xf32>
    %168 = arith.mulf %163, %167 : vector<1x32xf32>
    %169 = vector.extract_strided_slice %11 {offsets = [5, 0], sizes = [1, 128], strides = [1, 1]} : vector<8x128xf32> to vector<1x128xf32>
    %cst_28 = arith.constant dense<0.000000e+00> : vector<1x128xf32>
    %170 = tpu.matmul %152, %0, %cst_28 {dimension_numbers = #tpu.dot_dimension_numbers<[1], [0], [0], [1], [0, 0, 1, 1], [], []>} : vector<1x32xf32>, vector<32x128xf32>, vector<1x128xf32> -> vector<1x128xf32>
    %171 = arith.addf %169, %170 : vector<1x128xf32>
    %172 = math.tanh %171 : vector<1x128xf32>
    %173 = arith.mulf %172, %20 : vector<1x128xf32>
    %174 = arith.addf %173, %23 : vector<1x128xf32>
    %175 = vector.extract_strided_slice %174 {offsets = [0, 0], sizes = [1, 32], strides = [1, 1]} : vector<1x128xf32> to vector<1x32xf32>
    %176 = vector.extract_strided_slice %174 {offsets = [0, 32], sizes = [1, 32], strides = [1, 1]} : vector<1x128xf32> to vector<1x32xf32>
    %177 = vector.extract_strided_slice %174 {offsets = [0, 64], sizes = [1, 32], strides = [1, 1]} : vector<1x128xf32> to vector<1x32xf32>
    %178 = vector.extract_strided_slice %174 {offsets = [0, 96], sizes = [1, 32], strides = [1, 1]} : vector<1x128xf32> to vector<1x32xf32>
    %179 = arith.mulf %176, %150 : vector<1x32xf32>
    %180 = arith.mulf %175, %177 : vector<1x32xf32>
    %181 = arith.addf %179, %180 : vector<1x32xf32>
    %182 = math.tanh %181 : vector<1x32xf32>
    %183 = arith.mulf %178, %182 : vector<1x32xf32>
    %cst_29 = arith.constant dense<0.000000e+00> : vector<1x128xf32>
    %184 = tpu.matmul %183, %1, %cst_29 {dimension_numbers = #tpu.dot_dimension_numbers<[1], [0], [0], [1], [0, 0, 1, 1], [], []>} : vector<1x32xf32>, vector<32x128xf32>, vector<1x128xf32> -> vector<1x128xf32>
    %cst_30 = arith.constant dense<0.000000e+00> : vector<1x128xf32>
    %185 = tpu.matmul %168, %2, %cst_30 {dimension_numbers = #tpu.dot_dimension_numbers<[1], [0], [0], [1], [0, 0, 1, 1], [], []>} : vector<1x32xf32>, vector<32x128xf32>, vector<1x128xf32> -> vector<1x128xf32>
    %186 = arith.addf %184, %185 : vector<1x128xf32>
    %187 = arith.addf %186, %5 : vector<1x128xf32>
    %188 = math.tanh %187 : vector<1x128xf32>
    %189 = arith.mulf %188, %20 : vector<1x128xf32>
    %190 = arith.addf %189, %23 : vector<1x128xf32>
    %191 = vector.extract_strided_slice %190 {offsets = [0, 0], sizes = [1, 32], strides = [1, 1]} : vector<1x128xf32> to vector<1x32xf32>
    %192 = vector.extract_strided_slice %190 {offsets = [0, 32], sizes = [1, 32], strides = [1, 1]} : vector<1x128xf32> to vector<1x32xf32>
    %193 = vector.extract_strided_slice %190 {offsets = [0, 64], sizes = [1, 32], strides = [1, 1]} : vector<1x128xf32> to vector<1x32xf32>
    %194 = vector.extract_strided_slice %190 {offsets = [0, 96], sizes = [1, 32], strides = [1, 1]} : vector<1x128xf32> to vector<1x32xf32>
    %195 = arith.mulf %192, %166 : vector<1x32xf32>
    %196 = arith.mulf %191, %193 : vector<1x32xf32>
    %197 = arith.addf %195, %196 : vector<1x32xf32>
    %198 = math.tanh %197 : vector<1x32xf32>
    %199 = arith.mulf %194, %198 : vector<1x32xf32>
    %200 = vector.extract_strided_slice %11 {offsets = [6, 0], sizes = [1, 128], strides = [1, 1]} : vector<8x128xf32> to vector<1x128xf32>
    %cst_31 = arith.constant dense<0.000000e+00> : vector<1x128xf32>
    %201 = tpu.matmul %183, %0, %cst_31 {dimension_numbers = #tpu.dot_dimension_numbers<[1], [0], [0], [1], [0, 0, 1, 1], [], []>} : vector<1x32xf32>, vector<32x128xf32>, vector<1x128xf32> -> vector<1x128xf32>
    %202 = arith.addf %200, %201 : vector<1x128xf32>
    %203 = math.tanh %202 : vector<1x128xf32>
    %204 = arith.mulf %203, %20 : vector<1x128xf32>
    %205 = arith.addf %204, %23 : vector<1x128xf32>
    %206 = vector.extract_strided_slice %205 {offsets = [0, 0], sizes = [1, 32], strides = [1, 1]} : vector<1x128xf32> to vector<1x32xf32>
    %207 = vector.extract_strided_slice %205 {offsets = [0, 32], sizes = [1, 32], strides = [1, 1]} : vector<1x128xf32> to vector<1x32xf32>
    %208 = vector.extract_strided_slice %205 {offsets = [0, 64], sizes = [1, 32], strides = [1, 1]} : vector<1x128xf32> to vector<1x32xf32>
    %209 = vector.extract_strided_slice %205 {offsets = [0, 96], sizes = [1, 32], strides = [1, 1]} : vector<1x128xf32> to vector<1x32xf32>
    %210 = arith.mulf %207, %181 : vector<1x32xf32>
    %211 = arith.mulf %206, %208 : vector<1x32xf32>
    %212 = arith.addf %210, %211 : vector<1x32xf32>
    %213 = math.tanh %212 : vector<1x32xf32>
    %214 = arith.mulf %209, %213 : vector<1x32xf32>
    %cst_32 = arith.constant dense<0.000000e+00> : vector<1x128xf32>
    %215 = tpu.matmul %214, %1, %cst_32 {dimension_numbers = #tpu.dot_dimension_numbers<[1], [0], [0], [1], [0, 0, 1, 1], [], []>} : vector<1x32xf32>, vector<32x128xf32>, vector<1x128xf32> -> vector<1x128xf32>
    %cst_33 = arith.constant dense<0.000000e+00> : vector<1x128xf32>
    %216 = tpu.matmul %199, %2, %cst_33 {dimension_numbers = #tpu.dot_dimension_numbers<[1], [0], [0], [1], [0, 0, 1, 1], [], []>} : vector<1x32xf32>, vector<32x128xf32>, vector<1x128xf32> -> vector<1x128xf32>
    %217 = arith.addf %215, %216 : vector<1x128xf32>
    %218 = arith.addf %217, %5 : vector<1x128xf32>
    %219 = math.tanh %218 : vector<1x128xf32>
    %220 = arith.mulf %219, %20 : vector<1x128xf32>
    %221 = arith.addf %220, %23 : vector<1x128xf32>
    %222 = vector.extract_strided_slice %221 {offsets = [0, 0], sizes = [1, 32], strides = [1, 1]} : vector<1x128xf32> to vector<1x32xf32>
    %223 = vector.extract_strided_slice %221 {offsets = [0, 32], sizes = [1, 32], strides = [1, 1]} : vector<1x128xf32> to vector<1x32xf32>
    %224 = vector.extract_strided_slice %221 {offsets = [0, 64], sizes = [1, 32], strides = [1, 1]} : vector<1x128xf32> to vector<1x32xf32>
    %225 = vector.extract_strided_slice %221 {offsets = [0, 96], sizes = [1, 32], strides = [1, 1]} : vector<1x128xf32> to vector<1x32xf32>
    %226 = arith.mulf %223, %197 : vector<1x32xf32>
    %227 = arith.mulf %222, %224 : vector<1x32xf32>
    %228 = arith.addf %226, %227 : vector<1x32xf32>
    %229 = math.tanh %228 : vector<1x32xf32>
    %230 = arith.mulf %225, %229 : vector<1x32xf32>
    %231 = vector.extract_strided_slice %11 {offsets = [7, 0], sizes = [1, 128], strides = [1, 1]} : vector<8x128xf32> to vector<1x128xf32>
    %cst_34 = arith.constant dense<0.000000e+00> : vector<1x128xf32>
    %232 = tpu.matmul %214, %0, %cst_34 {dimension_numbers = #tpu.dot_dimension_numbers<[1], [0], [0], [1], [0, 0, 1, 1], [], []>} : vector<1x32xf32>, vector<32x128xf32>, vector<1x128xf32> -> vector<1x128xf32>
    %233 = arith.addf %231, %232 : vector<1x128xf32>
    %234 = math.tanh %233 : vector<1x128xf32>
    %235 = arith.mulf %234, %20 : vector<1x128xf32>
    %236 = arith.addf %235, %23 : vector<1x128xf32>
    %237 = vector.extract_strided_slice %236 {offsets = [0, 0], sizes = [1, 32], strides = [1, 1]} : vector<1x128xf32> to vector<1x32xf32>
    %238 = vector.extract_strided_slice %236 {offsets = [0, 32], sizes = [1, 32], strides = [1, 1]} : vector<1x128xf32> to vector<1x32xf32>
    %239 = vector.extract_strided_slice %236 {offsets = [0, 64], sizes = [1, 32], strides = [1, 1]} : vector<1x128xf32> to vector<1x32xf32>
    %240 = vector.extract_strided_slice %236 {offsets = [0, 96], sizes = [1, 32], strides = [1, 1]} : vector<1x128xf32> to vector<1x32xf32>
    %241 = arith.mulf %238, %212 : vector<1x32xf32>
    %242 = arith.mulf %237, %239 : vector<1x32xf32>
    %243 = arith.addf %241, %242 : vector<1x32xf32>
    %244 = math.tanh %243 : vector<1x32xf32>
    %245 = arith.mulf %240, %244 : vector<1x32xf32>
    %cst_35 = arith.constant dense<0.000000e+00> : vector<1x128xf32>
    %246 = tpu.matmul %245, %1, %cst_35 {dimension_numbers = #tpu.dot_dimension_numbers<[1], [0], [0], [1], [0, 0, 1, 1], [], []>} : vector<1x32xf32>, vector<32x128xf32>, vector<1x128xf32> -> vector<1x128xf32>
    %cst_36 = arith.constant dense<0.000000e+00> : vector<1x128xf32>
    %247 = tpu.matmul %230, %2, %cst_36 {dimension_numbers = #tpu.dot_dimension_numbers<[1], [0], [0], [1], [0, 0, 1, 1], [], []>} : vector<1x32xf32>, vector<32x128xf32>, vector<1x128xf32> -> vector<1x128xf32>
    %248 = arith.addf %246, %247 : vector<1x128xf32>
    %249 = arith.addf %248, %5 : vector<1x128xf32>
    %250 = math.tanh %249 : vector<1x128xf32>
    %251 = arith.mulf %250, %20 : vector<1x128xf32>
    %252 = arith.addf %251, %23 : vector<1x128xf32>
    %253 = vector.extract_strided_slice %252 {offsets = [0, 0], sizes = [1, 32], strides = [1, 1]} : vector<1x128xf32> to vector<1x32xf32>
    %254 = vector.extract_strided_slice %252 {offsets = [0, 32], sizes = [1, 32], strides = [1, 1]} : vector<1x128xf32> to vector<1x32xf32>
    %255 = vector.extract_strided_slice %252 {offsets = [0, 64], sizes = [1, 32], strides = [1, 1]} : vector<1x128xf32> to vector<1x32xf32>
    %256 = vector.extract_strided_slice %252 {offsets = [0, 96], sizes = [1, 32], strides = [1, 1]} : vector<1x128xf32> to vector<1x32xf32>
    %257 = arith.mulf %254, %228 : vector<1x32xf32>
    %258 = arith.mulf %253, %255 : vector<1x32xf32>
    %259 = arith.addf %257, %258 : vector<1x32xf32>
    %260 = math.tanh %259 : vector<1x32xf32>
    %261 = arith.mulf %256, %260 : vector<1x32xf32>
    %cst_37 = arith.constant dense<0.000000e+00> : vector<1x128xf32>
    %262 = tpu.matmul %261, %3, %cst_37 {dimension_numbers = #tpu.dot_dimension_numbers<[1], [0], [0], [1], [0, 0, 1, 1], [], []>} : vector<1x32xf32>, vector<32x128xf32>, vector<1x128xf32> -> vector<1x128xf32>
    %263 = arith.addf %262, %6 : vector<1x128xf32>
    %c0_38 = arith.constant 0 : index
    %c0_39 = arith.constant 0 : index
    %264 = vector.load %arg3[%c0_38, %c0_39] : memref<1x128xf32, #tpu.memory_space<vmem>>, vector<1x128xf32>
    tpu.vector_store %arg3[%c0_38, %c0_39], %263 {strides = array<i32>} : memref<1x128xf32, #tpu.memory_space<vmem>>, vector<1x128xf32>,
    return
  }
}

</mosaic_0001>

<llo_original>
// kernel: _forward_jit.1
$region0: #{_forward_jit.1}
  #allocation0 [shape = 'u32[]', space=smem, size = 0x4, offset = 0x4, fixed_abs, tag = 'smem constant byte address 0x4 - core index']
  #allocation1 [shape = 'u32[144,128]{1,0:T(1,128)}', space=vmem, size = 0x12000, scoped, tag = 'internal scratch']
  %s0 = inlined_call_operand.vmem [shape: f32[8,128], index: 0, kind: input, shape index: {}]
  %s1 = inlined_call_operand.hbm [shape: f32[128,128], index: 1, kind: input, shape index: {}]
  %s2 = inlined_call_operand.hbm [shape: f32[136,128], index: 2, kind: input, shape index: {}]
  %s3 = inlined_call_operand.vmem [shape: f32[1,128], index: 3, kind: output, shape index: {}]
  %s4 = sld [smem:[#allocation0]]
  $region30: #{_forward_jit.1} parent=0
    _
  %s6 = ssub.s32 1, %s4
  %s7 = scalar_select 0, %s6, %s4
  $region1: #{_forward_jit.1} parent=0
    #allocation2 [shape = 'u8[65536]{0}', space=vmem, size = 0x10000, scoped, tag = 'input window, operand 1, single buffered']
    #allocation3 [shape = 's32[1]{0}', space=sflag, size = 0x4, scoped, tag = 'scoped memory for _forward_jit.1']
    #allocation4 [shape = 'u8[69632]{0}', space=vmem, size = 0x11000, scoped, tag = 'input window, operand 2, single buffered']
    #allocation5 [shape = 's32[1]{0}', space=sflag, size = 0x4, scoped, tag = 'scoped memory for _forward_jit.1']
    %8 = vsyncpa [#allocation3], 0
    %9 = vsyncpa [#allocation5], 0
    // Predicated region
    $region2: #{_forward_jit.1} parent=1 // pred_check
      _
    $region3: #{_forward_jit.1} parent=1 // pred_check_branch
      %11 = sbr.rel (0) target = $region5
    $region4: #{_forward_jit.1} parent=1 // pred_region
      _
    $region5: #{_forward_jit.1} parent=1 // pred_fallthru
      _
    // Predicated region
    $region6: #{_forward_jit.1} parent=1 // pred_check
      _
    $region7: #{_forward_jit.1} parent=1 // pred_check_branch
      %13 = sbr.rel (0) target = $region9
    $region8: #{_forward_jit.1} parent=1 // pred_region
      %s15 = ssub.s32 2048, 2048
      %16 = vsyncadd [#allocation3], %s15
      %s17 = sshll.u32 [#allocation2], 4
      %s18 = int_to_ptr.vmem [resolvable:$true] %s17
      %23 = dma.hbm_to_vmem [thread:$0]  %s1, 2048, %s18, [#allocation3], 128, 128, 8
    $region9: #{_forward_jit.1} parent=1 // pred_fallthru
      _
    // Predicated region
    $region10: #{_forward_jit.1} parent=1 // pred_check
      _
    $region11: #{_forward_jit.1} parent=1 // pred_check_branch
      %25 = sbr.rel (0) target = $region13
    $region12: #{_forward_jit.1} parent=1 // pred_region
      %s27 = ssub.s32 2176, 2176
      %28 = vsyncadd [#allocation5], %s27
      %s29 = sshll.u32 [#allocation4], 4
      %s30 = int_to_ptr.vmem [resolvable:$true] %s29
      %35 = dma.hbm_to_vmem [thread:$0]  %s2, 2176, %s30, [#allocation5], 128, 128, 8
    $region13: #{_forward_jit.1} parent=1 // pred_fallthru
      _
    // Predicated region
    $region14: #{_forward_jit.1} parent=1 // pred_check
      _
    $region15: #{_forward_jit.1} parent=1 // pred_check_branch
      %37 = sbr.rel (0) target = $region17
    $region16: #{_forward_jit.1} parent=1 // pred_region
      %38 = dma.done [#allocation3], 2048
    $region17: #{_forward_jit.1} parent=1 // pred_fallthru
      _
    // Predicated region
    $region18: #{_forward_jit.1} parent=1 // pred_check
      _
    $region19: #{_forward_jit.1} parent=1 // pred_check_branch
      %40 = sbr.rel (0) target = $region21
    $region20: #{_forward_jit.1} parent=1 // pred_region
      %41 = dma.done [#allocation5], 2176
    $region21: #{_forward_jit.1} parent=1 // pred_fallthru
      _
    %v42 = vld [vmem:[#allocation4] sm:$0xff]
    %v43 = vld [vmem:[#allocation4 + $0x8] sm:$0xff]
    %v44 = vld [vmem:[#allocation4 + $0x10] sm:$0xff]
    %v45 = vld [vmem:[#allocation4 + $0x18] sm:$0xff]
    %v46 = vld [vmem:[#allocation4 + $0x20] sm:$0xff]
    %v47 = vld [vmem:[#allocation4 + $0x28] sm:$0xff]
    %v48 = vld [vmem:[#allocation4 + $0x30] sm:$0xff]
    %v49 = vld [vmem:[#allocation4 + $0x38] sm:$0xff]
    %v50 = vld [vmem:[#allocation4 + $0x40] sm:$0xff]
    %v51 = vld [vmem:[#allocation4 + $0x48] sm:$0xff]
    %v52 = vld [vmem:[#allocation4 + $0x50] sm:$0xff]
    %v53 = vld [vmem:[#allocation4 + $0x58] sm:$0xff]
    %v54 = vld [vmem:[#allocation4 + $0x60] sm:$0xff]
    %v55 = vld [vmem:[#allocation4 + $0x68] sm:$0xff]
    %v56 = vld [vmem:[#allocation4 + $0x70] sm:$0xff]
    %v57 = vld [vmem:[#allocation4 + $0x78] sm:$0xff]
    %v58 = vld [vmem:[#allocation4 + $0x80] sm:$0x1]
    %v59 = vld [vmem:[#allocation4 + $0x81] sm:$0x1]
    %v60 = vld [vmem:[#allocation4 + $0x82] sm:$0x1]
    %v61 = vld [vmem:[%s0] sm:$0xff]
    %v62 = vld [vmem:[#allocation2] sm:$0xff]
    %v63 = vld [vmem:[#allocation2 + $0x8] sm:$0xff]
    %v64 = vld [vmem:[#allocation2 + $0x10] sm:$0xff]
    %v65 = vld [vmem:[#allocation2 + $0x18] sm:$0xff]
    %v66 = vld [vmem:[#allocation2 + $0x20] sm:$0xff]
    %v67 = vld [vmem:[#allocation2 + $0x28] sm:$0xff]
    %v68 = vld [vmem:[#allocation2 + $0x30] sm:$0xff]
    %v69 = vld [vmem:[#allocation2 + $0x38] sm:$0xff]
    %v70 = vld [vmem:[#allocation2 + $0x40] sm:$0xff]
    %v71 = vld [vmem:[#allocation2 + $0x48] sm:$0xff]
    %v72 = vld [vmem:[#allocation2 + $0x50] sm:$0xff]
    %v73 = vld [vmem:[#allocation2 + $0x58] sm:$0xff]
    %v74 = vld [vmem:[#allocation2 + $0x60] sm:$0xff]
    %v75 = vld [vmem:[#allocation2 + $0x68] sm:$0xff]
    %v76 = vld [vmem:[#allocation2 + $0x70] sm:$0xff]
    %v77 = vld [vmem:[#allocation2 + $0x78] sm:$0xff]
    %v78 = vlaneseq
    %v79 = vshrl.u32 %v78, 7
    %v80 = vsub.s32 0, %v79
    %v81 = vrot.slane %v58, %v80
    %82 = vmatprep.subr.mxu0 0.0
    %83 = vmatpush1.msra.mxu0 %v77
    %84 = vmatprep.subr.mxu0 0.0
    %85 = vmatpush1.msra.mxu0 %v76
    %86 = vmatprep.subr.mxu0 0.0
    %87 = vmatpush1.msra.mxu0 %v75
    %88 = vmatprep.subr.mxu0 0.0
    %89 = vmatpush1.msra.mxu0 %v74
    %90 = vmatprep.subr.mxu0 0.0
    %91 = vmatpush1.msra.mxu0 %v73
    %92 = vmatprep.subr.mxu0 0.0
    %93 = vmatpush1.msra.mxu0 %v72
    %94 = vmatprep.subr.mxu0 0.0
    %95 = vmatpush1.msra.mxu0 %v71
    %96 = vmatprep.subr.mxu0 0.0
    %97 = vmatpush1.msra.mxu0 %v70
    %98 = vmatprep.subr.mxu0 0.0
    %99 = vmatpush1.msra.mxu0 %v69
    %100 = vmatprep.subr.mxu0 0.0
    %101 = vmatpush1.msra.mxu0 %v68
    %102 = vmatprep.subr.mxu0 0.0
    %103 = vmatpush1.msra.mxu0 %v67
    %104 = vmatprep.subr.mxu0 0.0
    %105 = vmatpush1.msra.mxu0 %v66
    %106 = vmatprep.subr.mxu0 0.0
    %107 = vmatpush1.msra.mxu0 %v65
    %108 = vmatprep.subr.mxu0 0.0
    %109 = vmatpush1.msra.mxu0 %v64
    %110 = vmatprep.subr.mxu0 0.0
    %111 = vmatpush1.msra.mxu0 %v63
    %112 = vmatprep.subr.mxu0 0.0
    %113 = vmatpush1.msra.mxu0 %v62
    %114 = vmatprep.subr.mxu0 0.0
    %115 = vmatpush2.msra.mxu0 0.0
    %116 = vmatprep.subr.mxu0 0.0
    %117 = vmatpush2.msra.mxu0 0.0
    %118 = vmatprep.subr.mxu0 0.0
    %119 = vmatpush2.msra.mxu0 0.0
    %120 = vmatprep.subr.mxu0 0.0
    %121 = vmatpush2.msra.mxu0 0.0
    %122 = vmatprep.subr.mxu0 0.0
    %123 = vmatpush2.msra.mxu0 0.0
    %124 = vmatprep.subr.mxu0 0.0
    %125 = vmatpush2.msra.mxu0 0.0
    %126 = vmatprep.subr.mxu0 0.0
    %127 = vmatpush2.msra.mxu0 0.0
    %128 = vmatprep.subr.mxu0 0.0
    %129 = vmatpush2.msra.mxu0 0.0
    %130 = vmatprep.subr.mxu0 0.0
    %131 = vmatpush2.msra.mxu0 0.0
    %132 = vmatprep.subr.mxu0 0.0
    %133 = vmatpush2.msra.mxu0 0.0
    %134 = vmatprep.subr.mxu0 0.0
    %135 = vmatpush2.msra.mxu0 0.0
    %136 = vmatprep.subr.mxu0 0.0
    %137 = vmatpush2.msra.mxu0 0.0
    %138 = vmatprep.subr.mxu0 0.0
    %139 = vmatpush2.msra.mxu0 0.0
    %140 = vmatprep.subr.mxu0 0.0
    %141 = vmatpush2.msra.mxu0 0.0
    %142 = vmatprep.subr.mxu0 0.0
    %143 = vmatpush2.msra.mxu0 0.0
    %144 = vmatprep.subr.mxu0 0.0
    %145 = vmatpush2.msra.mxu0 0.0
    %146 = vmatprep.mubr.f32.mxu0 0.0
    %147 = vmatmul.mubr.f32.gmra.mxu0 %v61
    %v148 = vpop.f32.mrf.mxu0
    %v149 = vadd.f32 %v81, %v148
    %v150 = vpop.f32.mrf.mxu0
    %151 = vdwg.mxu0
    %v152 = vlaneseq
    %v153 = vand.u32 %v152, 127
    %vm154 = vcmp.ge.s32.totalorder %v153, 64
    %vm155 = vcmp.lt.s32.totalorder %v153, 96
    %vm156 = vmand %vm154, %vm155
    %v157 = vsel %vm156, 1.0, 0.5
    %v158 = vsel %vm156, 0.0, 0.5
    %v159 = vtanh.pop %v149
    %v160 = vmul.f32 %v159, %v157
    %v161 = vadd.f32 %v160, %v158
    %163 = vrot.lane.b32.xlu0 %v161, 64
    %v164 = vpop.permute.xlu0 %163
    %v166 = vmul.f32 %v161, %v164
    %v167 = vtanh.pop %v166
    %169 = vrot.lane.b32.xlu0 %v167, 96
    %v170 = vpop.permute.xlu0 %169
    %v172 = vmul.f32 %v161, %v170
    %174 = vrot.lane.b32.xlu0 %v172, 32
    %v175 = vpop.permute.xlu0 %174
    %vm176 = vcmask 261120
    %v177 = vsel %vm176, %v175, 0
    %179 = vmatprep.subr.mxu0 0.0
    %180 = vmatpush1.msra.mxu0 0.0
    %181 = vmatprep.subr.mxu0 0.0
    %182 = vmatpush1.msra.mxu0 0.0
    %183 = vmatprep.subr.mxu0 0.0
    %184 = vmatpush1.msra.mxu0 0.0
    %185 = vmatprep.subr.mxu0 0.0
    %186 = vmatpush1.msra.mxu0 0.0
    %187 = vmatprep.subr.mxu0 0.0
    %188 = vmatpush1.msra.mxu0 0.0
    %189 = vmatprep.subr.mxu0 0.0
    %190 = vmatpush1.msra.mxu0 0.0
    %191 = vmatprep.subr.mxu0 0.0
    %192 = vmatpush1.msra.mxu0 0.0
    %193 = vmatprep.subr.mxu0 0.0
    %194 = vmatpush1.msra.mxu0 0.0
    %195 = vmatprep.subr.mxu0 0.0
    %196 = vmatpush1.msra.mxu0 0.0
    %197 = vmatprep.subr.mxu0 0.0
    %198 = vmatpush1.msra.mxu0 0.0
    %199 = vmatprep.subr.mxu0 0.0
    %200 = vmatpush1.msra.mxu0 0.0
    %201 = vmatprep.subr.mxu0 0.0
    %202 = vmatpush1.msra.mxu0 0.0
    %203 = vmatprep.subr.mxu0 0.0
    %204 = vmatpush1.msra.mxu0 %v49
    %205 = vmatprep.subr.mxu0 0.0
    %206 = vmatpush1.msra.mxu0 %v48
    %207 = vmatprep.subr.mxu0 0.0
    %208 = vmatpush1.msra.mxu0 %v47
    %209 = vmatprep.subr.mxu0 0.0
    %210 = vmatpush1.msra.mxu0 %v46
    %211 = vmatprep.subr.mxu0 0.0
    %212 = vmatpush2.msra.mxu0 0.0
    %213 = vmatprep.subr.mxu0 0.0
    %214 = vmatpush2.msra.mxu0 0.0
    %215 = vmatprep.subr.mxu0 0.0
    %216 = vmatpush2.msra.mxu0 0.0
    %217 = vmatprep.subr.mxu0 0.0
    %218 = vmatpush2.msra.mxu0 0.0
    %219 = vmatprep.subr.mxu0 0.0
    %220 = vmatpush2.msra.mxu0 0.0
    %221 = vmatprep.subr.mxu0 0.0
    %222 = vmatpush2.msra.mxu0 0.0
    %223 = vmatprep.subr.mxu0 0.0
    %224 = vmatpush2.msra.mxu0 0.0
    %225 = vmatprep.subr.mxu0 0.0
    %226 = vmatpush2.msra.mxu0 0.0
    %227 = vmatprep.subr.mxu0 0.0
    %228 = vmatpush2.msra.mxu0 0.0
    %229 = vmatprep.subr.mxu0 0.0
    %230 = vmatpush2.msra.mxu0 0.0
    %231 = vmatprep.subr.mxu0 0.0
    %232 = vmatpush2.msra.mxu0 0.0
    %233 = vmatprep.subr.mxu0 0.0
    %234 = vmatpush2.msra.mxu0 0.0
    %235 = vmatprep.subr.mxu0 0.0
    %236 = vmatpush2.msra.mxu0 0.0
    %237 = vmatprep.subr.mxu0 0.0
    %238 = vmatpush2.msra.mxu0 0.0
    %239 = vmatprep.subr.mxu0 0.0
    %240 = vmatpush2.msra.mxu0 0.0
    %241 = vmatprep.subr.mxu0 0.0
    %242 = vmatpush2.msra.mxu0 0.0
    %243 = vmatprep.mubr.f32.mxu0 0.0
    %244 = vmatmul.mubr.f32.gmra.mxu0 %v177
    %v245 = vpop.f32.mrf.mxu0
    %v246 = vadd.f32 %v59, %v245
    %v247 = vpop.f32.mrf.mxu0
    %248 = vdwg.mxu0
    %v249 = vtanh.pop %v246
    %v250 = vmul.f32 %v249, %v157
    %v251 = vadd.f32 %v250, %v158
    %253 = vrot.lane.b32.xlu0 %v251, 64
    %v254 = vpop.permute.xlu0 %253
    %v256 = vmul.f32 %v251, %v254
    %v257 = vtanh.pop %v256
    %259 = vrot.lane.b32.xlu0 %v257, 96
    %v260 = vpop.permute.xlu0 %259
    %v262 = vmul.f32 %v251, %v260
    %263 = vmatprep.subr.mxu0 0.0
    %264 = vmatpush1.msra.mxu0 0.0
    %265 = vmatprep.subr.mxu0 0.0
    %266 = vmatpush1.msra.mxu0 0.0
    %267 = vmatprep.subr.mxu0 0.0
    %268 = vmatpush1.msra.mxu0 0.0
    %269 = vmatprep.subr.mxu0 0.0
    %270 = vmatpush1.msra.mxu0 0.0
    %271 = vmatprep.subr.mxu0 0.0
    %272 = vmatpush1.msra.mxu0 0.0
    %273 = vmatprep.subr.mxu0 0.0
    %274 = vmatpush1.msra.mxu0 0.0
    %275 = vmatprep.subr.mxu0 0.0
    %276 = vmatpush1.msra.mxu0 0.0
    %277 = vmatprep.subr.mxu0 0.0
    %278 = vmatpush1.msra.mxu0 0.0
    %279 = vmatprep.subr.mxu0 0.0
    %280 = vmatpush1.msra.mxu0 0.0
    %281 = vmatprep.subr.mxu0 0.0
    %282 = vmatpush1.msra.mxu0 0.0
    %283 = vmatprep.subr.mxu0 0.0
    %284 = vmatpush1.msra.mxu0 0.0
    %285 = vmatprep.subr.mxu0 0.0
    %286 = vmatpush1.msra.mxu0 0.0
    %287 = vmatprep.subr.mxu0 0.0
    %288 = vmatpush1.msra.mxu0 %v45
    %289 = vmatprep.subr.mxu0 0.0
    %290 = vmatpush1.msra.mxu0 %v44
    %291 = vmatprep.subr.mxu0 0.0
    %292 = vmatpush1.msra.mxu0 %v43
    %293 = vmatprep.subr.mxu0 0.0
    %294 = vmatpush1.msra.mxu0 %v42
    %295 = vmatprep.subr.mxu0 0.0
    %296 = vmatpush2.msra.mxu0 0.0
    %297 = vmatprep.subr.mxu0 0.0
    %298 = vmatpush2.msra.mxu0 0.0
    %299 = vmatprep.subr.mxu0 0.0
    %300 = vmatpush2.msra.mxu0 0.0
    %301 = vmatprep.subr.mxu0 0.0
    %302 = vmatpush2.msra.mxu0 0.0
    %303 = vmatprep.subr.mxu0 0.0
    %304 = vmatpush2.msra.mxu0 0.0
    %305 = vmatprep.subr.mxu0 0.0
    %306 = vmatpush2.msra.mxu0 0.0
    %307 = vmatprep.subr.mxu0 0.0
    %308 = vmatpush2.msra.mxu0 0.0
    %309 = vmatprep.subr.mxu0 0.0
    %310 = vmatpush2.msra.mxu0 0.0
    %311 = vmatprep.subr.mxu0 0.0
    %312 = vmatpush2.msra.mxu0 0.0
    %313 = vmatprep.subr.mxu0 0.0
    %314 = vmatpush2.msra.mxu0 0.0
    %315 = vmatprep.subr.mxu0 0.0
    %316 = vmatpush2.msra.mxu0 0.0
    %317 = vmatprep.subr.mxu0 0.0
    %318 = vmatpush2.msra.mxu0 0.0
    %319 = vmatprep.subr.mxu0 0.0
    %320 = vmatpush2.msra.mxu0 0.0
    %321 = vmatprep.subr.mxu0 0.0
    %322 = vmatpush2.msra.mxu0 0.0
    %323 = vmatprep.subr.mxu0 0.0
    %324 = vmatpush2.msra.mxu0 0.0
    %325 = vmatprep.subr.mxu0 0.0
    %326 = vmatpush2.msra.mxu0 0.0
    %327 = vmatprep.mubr.f32.mxu0 0.0
    %328 = vmatmul.mubr.f32.gmra.mxu0 %v177
    %v329 = vpop.f32.mrf.mxu0
    %v330 = vadd.f32 0.0, %v329
    %v331 = vpop.f32.mrf.mxu0
    %332 = vdwg.mxu0
    %v334 = vrot.slane %v330, 7
    %v336 = vadd.f32 %v149, %v334
    %v337 = vtanh.pop %v336
    %v338 = vmul.f32 %v337, %v157
    %v339 = vadd.f32 %v338, %v158
    %v341 = vrot.slane %v166, 7
    %342 = vrot.lane.b32.xlu0 %v341, 32
    %v343 = vpop.permute.xlu0 %342
    %v345 = vmul.f32 %v339, %v343
    %347 = vrot.lane.b32.xlu0 %v339, 64
    %v348 = vpop.permute.xlu0 %347
    %v350 = vmul.f32 %v339, %v348
    %352 = vrot.lane.b32.xlu0 %v350, 32
    %v353 = vpop.permute.xlu0 %352
    %v355 = vadd.f32 %v345, %v353
    %v356 = vtanh.pop %v355
    %358 = vrot.lane.b32.xlu0 %v356, 64
    %v359 = vpop.permute.xlu0 %358
    %v361 = vmul.f32 %v339, %v359
    %363 = vrot.lane.b32.xlu0 %v262, 32
    %v364 = vpop.permute.xlu0 %363
    %v365 = vsel %vm176, %v364, 0
    %367 = vmatprep.subr.mxu0 0.0
    %368 = vmatpush1.msra.mxu0 0.0
    %369 = vmatprep.subr.mxu0 0.0
    %370 = vmatpush1.msra.mxu0 0.0
    %371 = vmatprep.subr.mxu0 0.0
    %372 = vmatpush1.msra.mxu0 0.0
    %373 = vmatprep.subr.mxu0 0.0
    %374 = vmatpush1.msra.mxu0 0.0
    %375 = vmatprep.subr.mxu0 0.0
    %376 = vmatpush1.msra.mxu0 0.0
    %377 = vmatprep.subr.mxu0 0.0
    %378 = vmatpush1.msra.mxu0 0.0
    %379 = vmatprep.subr.mxu0 0.0
    %380 = vmatpush1.msra.mxu0 0.0
    %381 = vmatprep.subr.mxu0 0.0
    %382 = vmatpush1.msra.mxu0 0.0
    %383 = vmatprep.subr.mxu0 0.0
    %384 = vmatpush1.msra.mxu0 0.0
    %385 = vmatprep.subr.mxu0 0.0
    %386 = vmatpush1.msra.mxu0 0.0
    %387 = vmatprep.subr.mxu0 0.0
    %388 = vmatpush1.msra.mxu0 0.0
    %389 = vmatprep.subr.mxu0 0.0
    %390 = vmatpush1.msra.mxu0 0.0
    %391 = vmatprep.subr.mxu0 0.0
    %392 = vmatpush1.msra.mxu0 %v53
    %393 = vmatprep.subr.mxu0 0.0
    %394 = vmatpush1.msra.mxu0 %v52
    %395 = vmatprep.subr.mxu0 0.0
    %396 = vmatpush1.msra.mxu0 %v51
    %397 = vmatprep.subr.mxu0 0.0
    %398 = vmatpush1.msra.mxu0 %v50
    %399 = vmatprep.subr.mxu0 0.0
    %400 = vmatpush2.msra.mxu0 0.0
    %401 = vmatprep.subr.mxu0 0.0
    %402 = vmatpush2.msra.mxu0 0.0
    %403 = vmatprep.subr.mxu0 0.0
    %404 = vmatpush2.msra.mxu0 0.0
    %405 = vmatprep.subr.mxu0 0.0
    %406 = vmatpush2.msra.mxu0 0.0
    %407 = vmatprep.subr.mxu0 0.0
    %408 = vmatpush2.msra.mxu0 0.0
    %409 = vmatprep.subr.mxu0 0.0
    %410 = vmatpush2.msra.mxu0 0.0
    %411 = vmatprep.subr.mxu0 0.0
    %412 = vmatpush2.msra.mxu0 0.0
    %413 = vmatprep.subr.mxu0 0.0
    %414 = vmatpush2.msra.mxu0 0.0
    %415 = vmatprep.subr.mxu0 0.0
    %416 = vmatpush2.msra.mxu0 0.0
    %417 = vmatprep.subr.mxu0 0.0
    %418 = vmatpush2.msra.mxu0 0.0
    %419 = vmatprep.subr.mxu0 0.0
    %420 = vmatpush2.msra.mxu0 0.0
    %421 = vmatprep.subr.mxu0 0.0
    %422 = vmatpush2.msra.mxu0 0.0
    %423 = vmatprep.subr.mxu0 0.0
    %424 = vmatpush2.msra.mxu0 0.0
    %425 = vmatprep.subr.mxu0 0.0
    %426 = vmatpush2.msra.mxu0 0.0
    %427 = vmatprep.subr.mxu0 0.0
    %428 = vmatpush2.msra.mxu0 0.0
    %429 = vmatprep.subr.mxu0 0.0
    %430 = vmatpush2.msra.mxu0 0.0
    %431 = vmatprep.mubr.f32.mxu0 0.0
    %432 = vmatmul.mubr.f32.gmra.mxu0 %v365
    %v433 = vpop.f32.mrf.mxu0
    %v434 = vadd.f32 0.0, %v433
    %v435 = vpop.f32.mrf.mxu0
    %436 = vdwg.mxu0
    %v438 = vrot.slane %v361, 1
    %439 = vrot.lane.b32.xlu0 %v438, 32
    %v440 = vpop.permute.xlu0 %439
    %v441 = vsel %vm176, %v440, 0
    %443 = vmatprep.subr.mxu0 0.0
    %444 = vmatpush1.msra.mxu0 0.0
    %445 = vmatprep.subr.mxu0 0.0
    %446 = vmatpush1.msra.mxu0 0.0
    %447 = vmatprep.subr.mxu0 0.0
    %448 = vmatpush1.msra.mxu0 0.0
    %449 = vmatprep.subr.mxu0 0.0
    %450 = vmatpush1.msra.mxu0 0.0
    %451 = vmatprep.subr.mxu0 0.0
    %452 = vmatpush1.msra.mxu0 0.0
    %453 = vmatprep.subr.mxu0 0.0
    %454 = vmatpush1.msra.mxu0 0.0
    %455 = vmatprep.subr.mxu0 0.0
    %456 = vmatpush1.msra.mxu0 0.0
    %457 = vmatprep.subr.mxu0 0.0
    %458 = vmatpush1.msra.mxu0 0.0
    %459 = vmatprep.subr.mxu0 0.0
    %460 = vmatpush1.msra.mxu0 0.0
    %461 = vmatprep.subr.mxu0 0.0
    %462 = vmatpush1.msra.mxu0 0.0
    %463 = vmatprep.subr.mxu0 0.0
    %464 = vmatpush1.msra.mxu0 0.0
    %465 = vmatprep.subr.mxu0 0.0
    %466 = vmatpush1.msra.mxu0 0.0
    %467 = vmatprep.subr.mxu0 0.0
    %468 = vmatpush1.msra.mxu0 %v49
    %469 = vmatprep.subr.mxu0 0.0
    %470 = vmatpush1.msra.mxu0 %v48
    %471 = vmatprep.subr.mxu0 0.0
    %472 = vmatpush1.msra.mxu0 %v47
    %473 = vmatprep.subr.mxu0 0.0
    %474 = vmatpush1.msra.mxu0 %v46
    %475 = vmatprep.subr.mxu0 0.0
    %476 = vmatpush2.msra.mxu0 0.0
    %477 = vmatprep.subr.mxu0 0.0
    %478 = vmatpush2.msra.mxu0 0.0
    %479 = vmatprep.subr.mxu0 0.0
    %480 = vmatpush2.msra.mxu0 0.0
    %481 = vmatprep.subr.mxu0 0.0
    %482 = vmatpush2.msra.mxu0 0.0
    %483 = vmatprep.subr.mxu0 0.0
    %484 = vmatpush2.msra.mxu0 0.0
    %485 = vmatprep.subr.mxu0 0.0
    %486 = vmatpush2.msra.mxu0 0.0
    %487 = vmatprep.subr.mxu0 0.0
    %488 = vmatpush2.msra.mxu0 0.0
    %489 = vmatprep.subr.mxu0 0.0
    %490 = vmatpush2.msra.mxu0 0.0
    %491 = vmatprep.subr.mxu0 0.0
    %492 = vmatpush2.msra.mxu0 0.0
    %493 = vmatprep.subr.mxu0 0.0
    %494 = vmatpush2.msra.mxu0 0.0
    %495 = vmatprep.subr.mxu0 0.0
    %496 = vmatpush2.msra.mxu0 0.0
    %497 = vmatprep.subr.mxu0 0.0
    %498 = vmatpush2.msra.mxu0 0.0
    %499 = vmatprep.subr.mxu0 0.0
    %500 = vmatpush2.msra.mxu0 0.0
    %501 = vmatprep.subr.mxu0 0.0
    %502 = vmatpush2.msra.mxu0 0.0
    %503 = vmatprep.subr.mxu0 0.0
    %504 = vmatpush2.msra.mxu0 0.0
    %505 = vmatprep.subr.mxu0 0.0
    %506 = vmatpush2.msra.mxu0 0.0
    %507 = vmatprep.mubr.f32.mxu0 0.0
    %508 = vmatmul.mubr.f32.gmra.mxu0 %v441
    %v509 = vpop.f32.mrf.mxu0
    %v510 = vadd.f32 %v434, %v509
    %v511 = vpop.f32.mrf.mxu0
    %512 = vdwg.mxu0
    %v513 = vadd.f32 %v510, %v59
    %v514 = vtanh.pop %v513
    %v515 = vmul.f32 %v514, %v157
    %v516 = vadd.f32 %v515, %v158
    %518 = vrot.lane.b32.xlu0 %v256, 32
    %v519 = vpop.permute.xlu0 %518
    %v521 = vmul.f32 %v516, %v519
    %523 = vrot.lane.b32.xlu0 %v516, 64
    %v524 = vpop.permute.xlu0 %523
    %v526 = vmul.f32 %v516, %v524
    %528 = vrot.lane.b32.xlu0 %v526, 32
    %v529 = vpop.permute.xlu0 %528
    %v531 = vadd.f32 %v521, %v529
    %v532 = vtanh.pop %v531
    %534 = vrot.lane.b32.xlu0 %v532, 64
    %v535 = vpop.permute.xlu0 %534
    %v537 = vmul.f32 %v516, %v535
    %538 = vmatprep.subr.mxu0 0.0
    %539 = vmatpush1.msra.mxu0 0.0
    %540 = vmatprep.subr.mxu0 0.0
    %541 = vmatpush1.msra.mxu0 0.0
    %542 = vmatprep.subr.mxu0 0.0
    %543 = vmatpush1.msra.mxu0 0.0
    %544 = vmatprep.subr.mxu0 0.0
    %545 = vmatpush1.msra.mxu0 0.0
    %546 = vmatprep.subr.mxu0 0.0
    %547 = vmatpush1.msra.mxu0 0.0
    %548 = vmatprep.subr.mxu0 0.0
    %549 = vmatpush1.msra.mxu0 0.0
    %550 = vmatprep.subr.mxu0 0.0
    %551 = vmatpush1.msra.mxu0 0.0
    %552 = vmatprep.subr.mxu0 0.0
    %553 = vmatpush1.msra.mxu0 0.0
    %554 = vmatprep.subr.mxu0 0.0
    %555 = vmatpush1.msra.mxu0 0.0
    %556 = vmatprep.subr.mxu0 0.0
    %557 = vmatpush1.msra.mxu0 0.0
    %558 = vmatprep.subr.mxu0 0.0
    %559 = vmatpush1.msra.mxu0 0.0
    %560 = vmatprep.subr.mxu0 0.0
    %561 = vmatpush1.msra.mxu0 0.0
    %562 = vmatprep.subr.mxu0 0.0
    %563 = vmatpush1.msra.mxu0 %v45
    %564 = vmatprep.subr.mxu0 0.0
    %565 = vmatpush1.msra.mxu0 %v44
    %566 = vmatprep.subr.mxu0 0.0
    %567 = vmatpush1.msra.mxu0 %v43
    %568 = vmatprep.subr.mxu0 0.0
    %569 = vmatpush1.msra.mxu0 %v42
    %570 = vmatprep.subr.mxu0 0.0
    %571 = vmatpush2.msra.mxu0 0.0
    %572 = vmatprep.subr.mxu0 0.0
    %573 = vmatpush2.msra.mxu0 0.0
    %574 = vmatprep.subr.mxu0 0.0
    %575 = vmatpush2.msra.mxu0 0.0
    %576 = vmatprep.subr.mxu0 0.0
    %577 = vmatpush2.msra.mxu0 0.0
    %578 = vmatprep.subr.mxu0 0.0
    %579 = vmatpush2.msra.mxu0 0.0
    %580 = vmatprep.subr.mxu0 0.0
    %581 = vmatpush2.msra.mxu0 0.0
    %582 = vmatprep.subr.mxu0 0.0
    %583 = vmatpush2.msra.mxu0 0.0
    %584 = vmatprep.subr.mxu0 0.0
    %585 = vmatpush2.msra.mxu0 0.0
    %586 = vmatprep.subr.mxu0 0.0
    %587 = vmatpush2.msra.mxu0 0.0
    %588 = vmatprep.subr.mxu0 0.0
    %589 = vmatpush2.msra.mxu0 0.0
    %590 = vmatprep.subr.mxu0 0.0
    %591 = vmatpush2.msra.mxu0 0.0
    %592 = vmatprep.subr.mxu0 0.0
    %593 = vmatpush2.msra.mxu0 0.0
    %594 = vmatprep.subr.mxu0 0.0
    %595 = vmatpush2.msra.mxu0 0.0
    %596 = vmatprep.subr.mxu0 0.0
    %597 = vmatpush2.msra.mxu0 0.0
    %598 = vmatprep.subr.mxu0 0.0
    %599 = vmatpush2.msra.mxu0 0.0
    %600 = vmatprep.subr.mxu0 0.0
    %601 = vmatpush2.msra.mxu0 0.0
    %602 = vmatprep.mubr.f32.mxu0 0.0
    %603 = vmatmul.mubr.f32.gmra.mxu0 %v441
    %v604 = vpop.f32.mrf.mxu0
    %v605 = vadd.f32 0.0, %v604
    %v606 = vpop.f32.mrf.mxu0
    %607 = vdwg.mxu0
    %v609 = vrot.slane %v605, 6
    %v611 = vadd.f32 %v149, %v609
    %v612 = vtanh.pop %v611
    %v613 = vmul.f32 %v612, %v157
    %v614 = vadd.f32 %v613, %v158
    %v616 = vrot.slane %v355, 7
    %v618 = vmul.f32 %v614, %v616
    %620 = vrot.lane.b32.xlu0 %v614, 64
    %v621 = vpop.permute.xlu0 %620
    %v623 = vmul.f32 %v614, %v621
    %625 = vrot.lane.b32.xlu0 %v623, 32
    %v626 = vpop.permute.xlu0 %625
    %v628 = vadd.f32 %v618, %v626
    %v629 = vtanh.pop %v628
    %631 = vrot.lane.b32.xlu0 %v629, 64
    %v632 = vpop.permute.xlu0 %631
    %v634 = vmul.f32 %v614, %v632
    %636 = vrot.lane.b32.xlu0 %v537, 32
    %v637 = vpop.permute.xlu0 %636
    %v638 = vsel %vm176, %v637, 0
    %640 = vmatprep.subr.mxu0 0.0
    %641 = vmatpush1.msra.mxu0 0.0
    %642 = vmatprep.subr.mxu0 0.0
    %643 = vmatpush1.msra.mxu0 0.0
    %644 = vmatprep.subr.mxu0 0.0
    %645 = vmatpush1.msra.mxu0 0.0
    %646 = vmatprep.subr.mxu0 0.0
    %647 = vmatpush1.msra.mxu0 0.0
    %648 = vmatprep.subr.mxu0 0.0
    %649 = vmatpush1.msra.mxu0 0.0
    %650 = vmatprep.subr.mxu0 0.0
    %651 = vmatpush1.msra.mxu0 0.0
    %652 = vmatprep.subr.mxu0 0.0
    %653 = vmatpush1.msra.mxu0 0.0
    %654 = vmatprep.subr.mxu0 0.0
    %655 = vmatpush1.msra.mxu0 0.0
    %656 = vmatprep.subr.mxu0 0.0
    %657 = vmatpush1.msra.mxu0 0.0
    %658 = vmatprep.subr.mxu0 0.0
    %659 = vmatpush1.msra.mxu0 0.0
    %660 = vmatprep.subr.mxu0 0.0
    %661 = vmatpush1.msra.mxu0 0.0
    %662 = vmatprep.subr.mxu0 0.0
    %663 = vmatpush1.msra.mxu0 0.0
    %664 = vmatprep.subr.mxu0 0.0
    %665 = vmatpush1.msra.mxu0 %v53
    %666 = vmatprep.subr.mxu0 0.0
    %667 = vmatpush1.msra.mxu0 %v52
    %668 = vmatprep.subr.mxu0 0.0
    %669 = vmatpush1.msra.mxu0 %v51
    %670 = vmatprep.subr.mxu0 0.0
    %671 = vmatpush1.msra.mxu0 %v50
    %672 = vmatprep.subr.mxu0 0.0
    %673 = vmatpush2.msra.mxu0 0.0
    %674 = vmatprep.subr.mxu0 0.0
    %675 = vmatpush2.msra.mxu0 0.0
    %676 = vmatprep.subr.mxu0 0.0
    %677 = vmatpush2.msra.mxu0 0.0
    %678 = vmatprep.subr.mxu0 0.0
    %679 = vmatpush2.msra.mxu0 0.0
    %680 = vmatprep.subr.mxu0 0.0
    %681 = vmatpush2.msra.mxu0 0.0
    %682 = vmatprep.subr.mxu0 0.0
    %683 = vmatpush2.msra.mxu0 0.0
    %684 = vmatprep.subr.mxu0 0.0
    %685 = vmatpush2.msra.mxu0 0.0
    %686 = vmatprep.subr.mxu0 0.0
    %687 = vmatpush2.msra.mxu0 0.0
    %688 = vmatprep.subr.mxu0 0.0
    %689 = vmatpush2.msra.mxu0 0.0
    %690 = vmatprep.subr.mxu0 0.0
    %691 = vmatpush2.msra.mxu0 0.0
    %692 = vmatprep.subr.mxu0 0.0
    %693 = vmatpush2.msra.mxu0 0.0
    %694 = vmatprep.subr.mxu0 0.0
    %695 = vmatpush2.msra.mxu0 0.0
    %696 = vmatprep.subr.mxu0 0.0
    %697 = vmatpush2.msra.mxu0 0.0
    %698 = vmatprep.subr.mxu0 0.0
    %699 = vmatpush2.msra.mxu0 0.0
    %700 = vmatprep.subr.mxu0 0.0
    %701 = vmatpush2.msra.mxu0 0.0
    %702 = vmatprep.subr.mxu0 0.0
    %703 = vmatpush2.msra.mxu0 0.0
    %704 = vmatprep.mubr.f32.mxu0 0.0
    %705 = vmatmul.mubr.f32.gmra.mxu0 %v638
    %v706 = vpop.f32.mrf.mxu0
    %v707 = vadd.f32 0.0, %v706
    %v708 = vpop.f32.mrf.mxu0
    %709 = vdwg.mxu0
    %v711 = vrot.slane %v634, 2
    %712 = vrot.lane.b32.xlu0 %v711, 32
    %v713 = vpop.permute.xlu0 %712
    %v714 = vsel %vm176, %v713, 0
    %716 = vmatprep.subr.mxu0 0.0
    %717 = vmatpush1.msra.mxu0 0.0
    %718 = vmatprep.subr.mxu0 0.0
    %719 = vmatpush1.msra.mxu0 0.0
    %720 = vmatprep.subr.mxu0 0.0
    %721 = vmatpush1.msra.mxu0 0.0
    %722 = vmatprep.subr.mxu0 0.0
    %723 = vmatpush1.msra.mxu0 0.0
    %724 = vmatprep.subr.mxu0 0.0
    %725 = vmatpush1.msra.mxu0 0.0
    %726 = vmatprep.subr.mxu0 0.0
    %727 = vmatpush1.msra.mxu0 0.0
    %728 = vmatprep.subr.mxu0 0.0
    %729 = vmatpush1.msra.mxu0 0.0
    %730 = vmatprep.subr.mxu0 0.0
    %731 = vmatpush1.msra.mxu0 0.0
    %732 = vmatprep.subr.mxu0 0.0
    %733 = vmatpush1.msra.mxu0 0.0
    %734 = vmatprep.subr.mxu0 0.0
    %735 = vmatpush1.msra.mxu0 0.0
    %736 = vmatprep.subr.mxu0 0.0
    %737 = vmatpush1.msra.mxu0 0.0
    %738 = vmatprep.subr.mxu0 0.0
    %739 = vmatpush1.msra.mxu0 0.0
    %740 = vmatprep.subr.mxu0 0.0
    %741 = vmatpush1.msra.mxu0 %v49
    %742 = vmatprep.subr.mxu0 0.0
    %743 = vmatpush1.msra.mxu0 %v48
    %744 = vmatprep.subr.mxu0 0.0
    %745 = vmatpush1.msra.mxu0 %v47
    %746 = vmatprep.subr.mxu0 0.0
    %747 = vmatpush1.msra.mxu0 %v46
    %748 = vmatprep.subr.mxu0 0.0
    %749 = vmatpush2.msra.mxu0 0.0
    %750 = vmatprep.subr.mxu0 0.0
    %751 = vmatpush2.msra.mxu0 0.0
    %752 = vmatprep.subr.mxu0 0.0
    %753 = vmatpush2.msra.mxu0 0.0
    %754 = vmatprep.subr.mxu0 0.0
    %755 = vmatpush2.msra.mxu0 0.0
    %756 = vmatprep.subr.mxu0 0.0
    %757 = vmatpush2.msra.mxu0 0.0
    %758 = vmatprep.subr.mxu0 0.0
    %759 = vmatpush2.msra.mxu0 0.0
    %760 = vmatprep.subr.mxu0 0.0
    %761 = vmatpush2.msra.mxu0 0.0
    %762 = vmatprep.subr.mxu0 0.0
    %763 = vmatpush2.msra.mxu0 0.0
    %764 = vmatprep.subr.mxu0 0.0
    %765 = vmatpush2.msra.mxu0 0.0
    %766 = vmatprep.subr.mxu0 0.0
    %767 = vmatpush2.msra.mxu0 0.0
    %768 = vmatprep.subr.mxu0 0.0
    %769 = vmatpush2.msra.mxu0 0.0
    %770 = vmatprep.subr.mxu0 0.0
    %771 = vmatpush2.msra.mxu0 0.0
    %772 = vmatprep.subr.mxu0 0.0
    %773 = vmatpush2.msra.mxu0 0.0
    %774 = vmatprep.subr.mxu0 0.0
    %775 = vmatpush2.msra.mxu0 0.0
    %776 = vmatprep.subr.mxu0 0.0
    %777 = vmatpush2.msra.mxu0 0.0
    %778 = vmatprep.subr.mxu0 0.0
    %779 = vmatpush2.msra.mxu0 0.0
    %780 = vmatprep.mubr.f32.mxu0 0.0
    %781 = vmatmul.mubr.f32.gmra.mxu0 %v714
    %v782 = vpop.f32.mrf.mxu0
    %v783 = vadd.f32 %v707, %v782
    %v784 = vpop.f32.mrf.mxu0
    %785 = vdwg.mxu0
    %v786 = vadd.f32 %v783, %v59
    %v787 = vtanh.pop %v786
    %v788 = vmul.f32 %v787, %v157
    %v789 = vadd.f32 %v788, %v158
    %v790 = vmul.f32 %v789, %v531
    %792 = vrot.lane.b32.xlu0 %v789, 64
    %v793 = vpop.permute.xlu0 %792
    %v795 = vmul.f32 %v789, %v793
    %797 = vrot.lane.b32.xlu0 %v795, 32
    %v798 = vpop.permute.xlu0 %797
    %v800 = vadd.f32 %v790, %v798
    %v801 = vtanh.pop %v800
    %803 = vrot.lane.b32.xlu0 %v801, 64
    %v804 = vpop.permute.xlu0 %803
    %v806 = vmul.f32 %v789, %v804
    %807 = vmatprep.subr.mxu0 0.0
    %808 = vmatpush1.msra.mxu0 0.0
    %809 = vmatprep.subr.mxu0 0.0
    %810 = vmatpush1.msra.mxu0 0.0
    %811 = vmatprep.subr.mxu0 0.0
    %812 = vmatpush1.msra.mxu0 0.0
    %813 = vmatprep.subr.mxu0 0.0
    %814 = vmatpush1.msra.mxu0 0.0
    %815 = vmatprep.subr.mxu0 0.0
    %816 = vmatpush1.msra.mxu0 0.0
    %817 = vmatprep.subr.mxu0 0.0
    %818 = vmatpush1.msra.mxu0 0.0
    %819 = vmatprep.subr.mxu0 0.0
    %820 = vmatpush1.msra.mxu0 0.0
    %821 = vmatprep.subr.mxu0 0.0
    %822 = vmatpush1.msra.mxu0 0.0
    %823 = vmatprep.subr.mxu0 0.0
    %824 = vmatpush1.msra.mxu0 0.0
    %825 = vmatprep.subr.mxu0 0.0
    %826 = vmatpush1.msra.mxu0 0.0
    %827 = vmatprep.subr.mxu0 0.0
    %828 = vmatpush1.msra.mxu0 0.0
    %829 = vmatprep.subr.mxu0 0.0
    %830 = vmatpush1.msra.mxu0 0.0
    %831 = vmatprep.subr.mxu0 0.0
    %832 = vmatpush1.msra.mxu0 %v45
    %833 = vmatprep.subr.mxu0 0.0
    %834 = vmatpush1.msra.mxu0 %v44
    %835 = vmatprep.subr.mxu0 0.0
    %836 = vmatpush1.msra.mxu0 %v43
    %837 = vmatprep.subr.mxu0 0.0
    %838 = vmatpush1.msra.mxu0 %v42
    %839 = vmatprep.subr.mxu0 0.0
    %840 = vmatpush2.msra.mxu0 0.0
    %841 = vmatprep.subr.mxu0 0.0
    %842 = vmatpush2.msra.mxu0 0.0
    %843 = vmatprep.subr.mxu0 0.0
    %844 = vmatpush2.msra.mxu0 0.0
    %845 = vmatprep.subr.mxu0 0.0
    %846 = vmatpush2.msra.mxu0 0.0
    %847 = vmatprep.subr.mxu0 0.0
    %848 = vmatpush2.msra.mxu0 0.0
    %849 = vmatprep.subr.mxu0 0.0
    %850 = vmatpush2.msra.mxu0 0.0
    %851 = vmatprep.subr.mxu0 0.0
    %852 = vmatpush2.msra.mxu0 0.0
    %853 = vmatprep.subr.mxu0 0.0
    %854 = vmatpush2.msra.mxu0 0.0
    %855 = vmatprep.subr.mxu0 0.0
    %856 = vmatpush2.msra.mxu0 0.0
    %857 = vmatprep.subr.mxu0 0.0
    %858 = vmatpush2.msra.mxu0 0.0
    %859 = vmatprep.subr.mxu0 0.0
    %860 = vmatpush2.msra.mxu0 0.0
    %861 = vmatprep.subr.mxu0 0.0
    %862 = vmatpush2.msra.mxu0 0.0
    %863 = vmatprep.subr.mxu0 0.0
    %864 = vmatpush2.msra.mxu0 0.0
    %865 = vmatprep.subr.mxu0 0.0
    %866 = vmatpush2.msra.mxu0 0.0
    %867 = vmatprep.subr.mxu0 0.0
    %868 = vmatpush2.msra.mxu0 0.0
    %869 = vmatprep.subr.mxu0 0.0
    %870 = vmatpush2.msra.mxu0 0.0
    %871 = vmatprep.mubr.f32.mxu0 0.0
    %872 = vmatmul.mubr.f32.gmra.mxu0 %v714
    %v873 = vpop.f32.mrf.mxu0
    %v874 = vadd.f32 0.0, %v873
    %v875 = vpop.f32.mrf.mxu0
    %876 = vdwg.mxu0
    %v878 = vrot.slane %v874, 5
    %v880 = vadd.f32 %v149, %v878
    %v881 = vtanh.pop %v880
    %v882 = vmul.f32 %v881, %v157
    %v883 = vadd.f32 %v882, %v158
    %v885 = vrot.slane %v628, 7
    %v887 = vmul.f32 %v883, %v885
    %889 = vrot.lane.b32.xlu0 %v883, 64
    %v890 = vpop.permute.xlu0 %889
    %v892 = vmul.f32 %v883, %v890
    %894 = vrot.lane.b32.xlu0 %v892, 32
    %v895 = vpop.permute.xlu0 %894
    %v897 = vadd.f32 %v887, %v895
    %v898 = vtanh.pop %v897
    %900 = vrot.lane.b32.xlu0 %v898, 64
    %v901 = vpop.permute.xlu0 %900
    %v903 = vmul.f32 %v883, %v901
    %905 = vrot.lane.b32.xlu0 %v806, 32
    %v906 = vpop.permute.xlu0 %905
    %v907 = vsel %vm176, %v906, 0
    %909 = vmatprep.subr.mxu0 0.0
    %910 = vmatpush1.msra.mxu0 0.0
    %911 = vmatprep.subr.mxu0 0.0
    %912 = vmatpush1.msra.mxu0 0.0
    %913 = vmatprep.subr.mxu0 0.0
    %914 = vmatpush1.msra.mxu0 0.0
    %915 = vmatprep.subr.mxu0 0.0
    %916 = vmatpush1.msra.mxu0 0.0
    %917 = vmatprep.subr.mxu0 0.0
    %918 = vmatpush1.msra.mxu0 0.0
    %919 = vmatprep.subr.mxu0 0.0
    %920 = vmatpush1.msra.mxu0 0.0
    %921 = vmatprep.subr.mxu0 0.0
    %922 = vmatpush1.msra.mxu0 0.0
    %923 = vmatprep.subr.mxu0 0.0
    %924 = vmatpush1.msra.mxu0 0.0
    %925 = vmatprep.subr.mxu0 0.0
    %926 = vmatpush1.msra.mxu0 0.0
    %927 = vmatprep.subr.mxu0 0.0
    %928 = vmatpush1.msra.mxu0 0.0
    %929 = vmatprep.subr.mxu0 0.0
    %930 = vmatpush1.msra.mxu0 0.0
    %931 = vmatprep.subr.mxu0 0.0
    %932 = vmatpush1.msra.mxu0 0.0
    %933 = vmatprep.subr.mxu0 0.0
    %934 = vmatpush1.msra.mxu0 %v53
    %935 = vmatprep.subr.mxu0 0.0
    %936 = vmatpush1.msra.mxu0 %v52
    %937 = vmatprep.subr.mxu0 0.0
    %938 = vmatpush1.msra.mxu0 %v51
    %939 = vmatprep.subr.mxu0 0.0
    %940 = vmatpush1.msra.mxu0 %v50
    %941 = vmatprep.subr.mxu0 0.0
    %942 = vmatpush2.msra.mxu0 0.0
    %943 = vmatprep.subr.mxu0 0.0
    %944 = vmatpush2.msra.mxu0 0.0
    %945 = vmatprep.subr.mxu0 0.0
    %946 = vmatpush2.msra.mxu0 0.0
    %947 = vmatprep.subr.mxu0 0.0
    %948 = vmatpush2.msra.mxu0 0.0
    %949 = vmatprep.subr.mxu0 0.0
    %950 = vmatpush2.msra.mxu0 0.0
    %951 = vmatprep.subr.mxu0 0.0
    %952 = vmatpush2.msra.mxu0 0.0
    %953 = vmatprep.subr.mxu0 0.0
    %954 = vmatpush2.msra.mxu0 0.0
    %955 = vmatprep.subr.mxu0 0.0
    %956 = vmatpush2.msra.mxu0 0.0
    %957 = vmatprep.subr.mxu0 0.0
    %958 = vmatpush2.msra.mxu0 0.0
    %959 = vmatprep.subr.mxu0 0.0
    %960 = vmatpush2.msra.mxu0 0.0
    %961 = vmatprep.subr.mxu0 0.0
    %962 = vmatpush2.msra.mxu0 0.0
    %963 = vmatprep.subr.mxu0 0.0
    %964 = vmatpush2.msra.mxu0 0.0
    %965 = vmatprep.subr.mxu0 0.0
    %966 = vmatpush2.msra.mxu0 0.0
    %967 = vmatprep.subr.mxu0 0.0
    %968 = vmatpush2.msra.mxu0 0.0
    %969 = vmatprep.subr.mxu0 0.0
    %970 = vmatpush2.msra.mxu0 0.0
    %971 = vmatprep.subr.mxu0 0.0
    %972 = vmatpush2.msra.mxu0 0.0
    %973 = vmatprep.mubr.f32.mxu0 0.0
    %974 = vmatmul.mubr.f32.gmra.mxu0 %v907
    %v975 = vpop.f32.mrf.mxu0
    %v976 = vadd.f32 0.0, %v975
    %v977 = vpop.f32.mrf.mxu0
    %978 = vdwg.mxu0
    %v980 = vrot.slane %v903, 3
    %981 = vrot.lane.b32.xlu0 %v980, 32
    %v982 = vpop.permute.xlu0 %981
    %v983 = vsel %vm176, %v982, 0
    %985 = vmatprep.subr.mxu0 0.0
    %986 = vmatpush1.msra.mxu0 0.0
    %987 = vmatprep.subr.mxu0 0.0
    %988 = vmatpush1.msra.mxu0 0.0
    %989 = vmatprep.subr.mxu0 0.0
    %990 = vmatpush1.msra.mxu0 0.0
    %991 = vmatprep.subr.mxu0 0.0
    %992 = vmatpush1.msra.mxu0 0.0
    %993 = vmatprep.subr.mxu0 0.0
    %994 = vmatpush1.msra.mxu0 0.0
    %995 = vmatprep.subr.mxu0 0.0
    %996 = vmatpush1.msra.mxu0 0.0
    %997 = vmatprep.subr.mxu0 0.0
    %998 = vmatpush1.msra.mxu0 0.0
    %999 = vmatprep.subr.mxu0 0.0
    %1000 = vmatpush1.msra.mxu0 0.0
    %1001 = vmatprep.subr.mxu0 0.0
    %1002 = vmatpush1.msra.mxu0 0.0
    %1003 = vmatprep.subr.mxu0 0.0
    %1004 = vmatpush1.msra.mxu0 0.0
    %1005 = vmatprep.subr.mxu0 0.0
    %1006 = vmatpush1.msra.mxu0 0.0
    %1007 = vmatprep.subr.mxu0 0.0
    %1008 = vmatpush1.msra.mxu0 0.0
    %1009 = vmatprep.subr.mxu0 0.0
    %1010 = vmatpush1.msra.mxu0 %v49
    %1011 = vmatprep.subr.mxu0 0.0
    %1012 = vmatpush1.msra.mxu0 %v48
    %1013 = vmatprep.subr.mxu0 0.0
    %1014 = vmatpush1.msra.mxu0 %v47
    %1015 = vmatprep.subr.mxu0 0.0
    %1016 = vmatpush1.msra.mxu0 %v46
    %1017 = vmatprep.subr.mxu0 0.0
    %1018 = vmatpush2.msra.mxu0 0.0
    %1019 = vmatprep.subr.mxu0 0.0
    %1020 = vmatpush2.msra.mxu0 0.0
    %1021 = vmatprep.subr.mxu0 0.0
    %1022 = vmatpush2.msra.mxu0 0.0
    %1023 = vmatprep.subr.mxu0 0.0
    %1024 = vmatpush2.msra.mxu0 0.0
    %1025 = vmatprep.subr.mxu0 0.0
    %1026 = vmatpush2.msra.mxu0 0.0
    %1027 = vmatprep.subr.mxu0 0.0
    %1028 = vmatpush2.msra.mxu0 0.0
    %1029 = vmatprep.subr.mxu0 0.0
    %1030 = vmatpush2.msra.mxu0 0.0
    %1031 = vmatprep.subr.mxu0 0.0
    %1032 = vmatpush2.msra.mxu0 0.0
    %1033 = vmatprep.subr.mxu0 0.0
    %1034 = vmatpush2.msra.mxu0 0.0
    %1035 = vmatprep.subr.mxu0 0.0
    %1036 = vmatpush2.msra.mxu0 0.0
    %1037 = vmatprep.subr.mxu0 0.0
    %1038 = vmatpush2.msra.mxu0 0.0
    %1039 = vmatprep.subr.mxu0 0.0
    %1040 = vmatpush2.msra.mxu0 0.0
    %1041 = vmatprep.subr.mxu0 0.0
    %1042 = vmatpush2.msra.mxu0 0.0
    %1043 = vmatprep.subr.mxu0 0.0
    %1044 = vmatpush2.msra.mxu0 0.0
    %1045 = vmatprep.subr.mxu0 0.0
    %1046 = vmatpush2.msra.mxu0 0.0
    %1047 = vmatprep.subr.mxu0 0.0
    %1048 = vmatpush2.msra.mxu0 0.0
    %1049 = vmatprep.mubr.f32.mxu0 0.0
    %1050 = vmatmul.mubr.f32.gmra.mxu0 %v983
    %v1051 = vpop.f32.mrf.mxu0
    %v1052 = vadd.f32 %v976, %v1051
    %v1053 = vpop.f32.mrf.mxu0
    %1054 = vdwg.mxu0
    %v1055 = vadd.f32 %v1052, %v59
    %v1056 = vtanh.pop %v1055
    %v1057 = vmul.f32 %v1056, %v157
    %v1058 = vadd.f32 %v1057, %v158
    %v1059 = vmul.f32 %v1058, %v800
    %1061 = vrot.lane.b32.xlu0 %v1058, 64
    %v1062 = vpop.permute.xlu0 %1061
    %v1064 = vmul.f32 %v1058, %v1062
    %1066 = vrot.lane.b32.xlu0 %v1064, 32
    %v1067 = vpop.permute.xlu0 %1066
    %v1069 = vadd.f32 %v1059, %v1067
    %v1070 = vtanh.pop %v1069
    %1072 = vrot.lane.b32.xlu0 %v1070, 64
    %v1073 = vpop.permute.xlu0 %1072
    %v1075 = vmul.f32 %v1058, %v1073
    %1076 = vmatprep.subr.mxu0 0.0
    %1077 = vmatpush1.msra.mxu0 0.0
    %1078 = vmatprep.subr.mxu0 0.0
    %1079 = vmatpush1.msra.mxu0 0.0
    %1080 = vmatprep.subr.mxu0 0.0
    %1081 = vmatpush1.msra.mxu0 0.0
    %1082 = vmatprep.subr.mxu0 0.0
    %1083 = vmatpush1.msra.mxu0 0.0
    %1084 = vmatprep.subr.mxu0 0.0
    %1085 = vmatpush1.msra.mxu0 0.0
    %1086 = vmatprep.subr.mxu0 0.0
    %1087 = vmatpush1.msra.mxu0 0.0
    %1088 = vmatprep.subr.mxu0 0.0
    %1089 = vmatpush1.msra.mxu0 0.0
    %1090 = vmatprep.subr.mxu0 0.0
    %1091 = vmatpush1.msra.mxu0 0.0
    %1092 = vmatprep.subr.mxu0 0.0
    %1093 = vmatpush1.msra.mxu0 0.0
    %1094 = vmatprep.subr.mxu0 0.0
    %1095 = vmatpush1.msra.mxu0 0.0
    %1096 = vmatprep.subr.mxu0 0.0
    %1097 = vmatpush1.msra.mxu0 0.0
    %1098 = vmatprep.subr.mxu0 0.0
    %1099 = vmatpush1.msra.mxu0 0.0
    %1100 = vmatprep.subr.mxu0 0.0
    %1101 = vmatpush1.msra.mxu0 %v45
    %1102 = vmatprep.subr.mxu0 0.0
    %1103 = vmatpush1.msra.mxu0 %v44
    %1104 = vmatprep.subr.mxu0 0.0
    %1105 = vmatpush1.msra.mxu0 %v43
    %1106 = vmatprep.subr.mxu0 0.0
    %1107 = vmatpush1.msra.mxu0 %v42
    %1108 = vmatprep.subr.mxu0 0.0
    %1109 = vmatpush2.msra.mxu0 0.0
    %1110 = vmatprep.subr.mxu0 0.0
    %1111 = vmatpush2.msra.mxu0 0.0
    %1112 = vmatprep.subr.mxu0 0.0
    %1113 = vmatpush2.msra.mxu0 0.0
    %1114 = vmatprep.subr.mxu0 0.0
    %1115 = vmatpush2.msra.mxu0 0.0
    %1116 = vmatprep.subr.mxu0 0.0
    %1117 = vmatpush2.msra.mxu0 0.0
    %1118 = vmatprep.subr.mxu0 0.0
    %1119 = vmatpush2.msra.mxu0 0.0
    %1120 = vmatprep.subr.mxu0 0.0
    %1121 = vmatpush2.msra.mxu0 0.0
    %1122 = vmatprep.subr.mxu0 0.0
    %1123 = vmatpush2.msra.mxu0 0.0
    %1124 = vmatprep.subr.mxu0 0.0
    %1125 = vmatpush2.msra.mxu0 0.0
    %1126 = vmatprep.subr.mxu0 0.0
    %1127 = vmatpush2.msra.mxu0 0.0
    %1128 = vmatprep.subr.mxu0 0.0
    %1129 = vmatpush2.msra.mxu0 0.0
    %1130 = vmatprep.subr.mxu0 0.0
    %1131 = vmatpush2.msra.mxu0 0.0
    %1132 = vmatprep.subr.mxu0 0.0
    %1133 = vmatpush2.msra.mxu0 0.0
    %1134 = vmatprep.subr.mxu0 0.0
    %1135 = vmatpush2.msra.mxu0 0.0
    %1136 = vmatprep.subr.mxu0 0.0
    %1137 = vmatpush2.msra.mxu0 0.0
    %1138 = vmatprep.subr.mxu0 0.0
    %1139 = vmatpush2.msra.mxu0 0.0
    %1140 = vmatprep.mubr.f32.mxu0 0.0
    %1141 = vmatmul.mubr.f32.gmra.mxu0 %v983
    %v1142 = vpop.f32.mrf.mxu0
    %v1143 = vadd.f32 0.0, %v1142
    %v1144 = vpop.f32.mrf.mxu0
    %1145 = vdwg.mxu0
    %v1147 = vrot.slane %v1143, 4
    %v1149 = vadd.f32 %v149, %v1147
    %v1150 = vtanh.pop %v1149
    %v1151 = vmul.f32 %v1150, %v157
    %v1152 = vadd.f32 %v1151, %v158
    %v1154 = vrot.slane %v897, 7
    %v1156 = vmul.f32 %v1152, %v1154
    %1158 = vrot.lane.b32.xlu0 %v1152, 64
    %v1159 = vpop.permute.xlu0 %1158
    %v1161 = vmul.f32 %v1152, %v1159
    %1163 = vrot.lane.b32.xlu0 %v1161, 32
    %v1164 = vpop.permute.xlu0 %1163
    %v1166 = vadd.f32 %v1156, %v1164
    %v1167 = vtanh.pop %v1166
    %1169 = vrot.lane.b32.xlu0 %v1167, 64
    %v1170 = vpop.permute.xlu0 %1169
    %v1172 = vmul.f32 %v1152, %v1170
    %1174 = vrot.lane.b32.xlu0 %v1075, 32
    %v1175 = vpop.permute.xlu0 %1174
    %v1176 = vsel %vm176, %v1175, 0
    %1178 = vmatprep.subr.mxu0 0.0
    %1179 = vmatpush1.msra.mxu0 0.0
    %1180 = vmatprep.subr.mxu0 0.0
    %1181 = vmatpush1.msra.mxu0 0.0
    %1182 = vmatprep.subr.mxu0 0.0
    %1183 = vmatpush1.msra.mxu0 0.0
    %1184 = vmatprep.subr.mxu0 0.0
    %1185 = vmatpush1.msra.mxu0 0.0
    %1186 = vmatprep.subr.mxu0 0.0
    %1187 = vmatpush1.msra.mxu0 0.0
    %1188 = vmatprep.subr.mxu0 0.0
    %1189 = vmatpush1.msra.mxu0 0.0
    %1190 = vmatprep.subr.mxu0 0.0
    %1191 = vmatpush1.msra.mxu0 0.0
    %1192 = vmatprep.subr.mxu0 0.0
    %1193 = vmatpush1.msra.mxu0 0.0
    %1194 = vmatprep.subr.mxu0 0.0
    %1195 = vmatpush1.msra.mxu0 0.0
    %1196 = vmatprep.subr.mxu0 0.0
    %1197 = vmatpush1.msra.mxu0 0.0
    %1198 = vmatprep.subr.mxu0 0.0
    %1199 = vmatpush1.msra.mxu0 0.0
    %1200 = vmatprep.subr.mxu0 0.0
    %1201 = vmatpush1.msra.mxu0 0.0
    %1202 = vmatprep.subr.mxu0 0.0
    %1203 = vmatpush1.msra.mxu0 %v53
    %1204 = vmatprep.subr.mxu0 0.0
    %1205 = vmatpush1.msra.mxu0 %v52
    %1206 = vmatprep.subr.mxu0 0.0
    %1207 = vmatpush1.msra.mxu0 %v51
    %1208 = vmatprep.subr.mxu0 0.0
    %1209 = vmatpush1.msra.mxu0 %v50
    %1210 = vmatprep.subr.mxu0 0.0
    %1211 = vmatpush2.msra.mxu0 0.0
    %1212 = vmatprep.subr.mxu0 0.0
    %1213 = vmatpush2.msra.mxu0 0.0
    %1214 = vmatprep.subr.mxu0 0.0
    %1215 = vmatpush2.msra.mxu0 0.0
    %1216 = vmatprep.subr.mxu0 0.0
    %1217 = vmatpush2.msra.mxu0 0.0
    %1218 = vmatprep.subr.mxu0 0.0
    %1219 = vmatpush2.msra.mxu0 0.0
    %1220 = vmatprep.subr.mxu0 0.0
    %1221 = vmatpush2.msra.mxu0 0.0
    %1222 = vmatprep.subr.mxu0 0.0
    %1223 = vmatpush2.msra.mxu0 0.0
    %1224 = vmatprep.subr.mxu0 0.0
    %1225 = vmatpush2.msra.mxu0 0.0
    %1226 = vmatprep.subr.mxu0 0.0
    %1227 = vmatpush2.msra.mxu0 0.0
    %1228 = vmatprep.subr.mxu0 0.0
    %1229 = vmatpush2.msra.mxu0 0.0
    %1230 = vmatprep.subr.mxu0 0.0
    %1231 = vmatpush2.msra.mxu0 0.0
    %1232 = vmatprep.subr.mxu0 0.0
    %1233 = vmatpush2.msra.mxu0 0.0
    %1234 = vmatprep.subr.mxu0 0.0
    %1235 = vmatpush2.msra.mxu0 0.0
    %1236 = vmatprep.subr.mxu0 0.0
    %1237 = vmatpush2.msra.mxu0 0.0
    %1238 = vmatprep.subr.mxu0 0.0
    %1239 = vmatpush2.msra.mxu0 0.0
    %1240 = vmatprep.subr.mxu0 0.0
    %1241 = vmatpush2.msra.mxu0 0.0
    %1242 = vmatprep.mubr.f32.mxu0 0.0
    %1243 = vmatmul.mubr.f32.gmra.mxu0 %v1176
    %v1244 = vpop.f32.mrf.mxu0
    %v1245 = vadd.f32 0.0, %v1244
    %v1246 = vpop.f32.mrf.mxu0
    %1247 = vdwg.mxu0
    %v1249 = vrot.slane %v1172, 4
    %1250 = vrot.lane.b32.xlu0 %v1249, 32
    %v1251 = vpop.permute.xlu0 %1250
    %v1252 = vsel %vm176, %v1251, 0
    %1254 = vmatprep.subr.mxu0 0.0
    %1255 = vmatpush1.msra.mxu0 0.0
    %1256 = vmatprep.subr.mxu0 0.0
    %1257 = vmatpush1.msra.mxu0 0.0
    %1258 = vmatprep.subr.mxu0 0.0
    %1259 = vmatpush1.msra.mxu0 0.0
    %1260 = vmatprep.subr.mxu0 0.0
    %1261 = vmatpush1.msra.mxu0 0.0
    %1262 = vmatprep.subr.mxu0 0.0
    %1263 = vmatpush1.msra.mxu0 0.0
    %1264 = vmatprep.subr.mxu0 0.0
    %1265 = vmatpush1.msra.mxu0 0.0
    %1266 = vmatprep.subr.mxu0 0.0
    %1267 = vmatpush1.msra.mxu0 0.0
    %1268 = vmatprep.subr.mxu0 0.0
    %1269 = vmatpush1.msra.mxu0 0.0
    %1270 = vmatprep.subr.mxu0 0.0
    %1271 = vmatpush1.msra.mxu0 0.0
    %1272 = vmatprep.subr.mxu0 0.0
    %1273 = vmatpush1.msra.mxu0 0.0
    %1274 = vmatprep.subr.mxu0 0.0
    %1275 = vmatpush1.msra.mxu0 0.0
    %1276 = vmatprep.subr.mxu0 0.0
    %1277 = vmatpush1.msra.mxu0 0.0
    %1278 = vmatprep.subr.mxu0 0.0
    %1279 = vmatpush1.msra.mxu0 %v49
    %1280 = vmatprep.subr.mxu0 0.0
    %1281 = vmatpush1.msra.mxu0 %v48
    %1282 = vmatprep.subr.mxu0 0.0
    %1283 = vmatpush1.msra.mxu0 %v47
    %1284 = vmatprep.subr.mxu0 0.0
    %1285 = vmatpush1.msra.mxu0 %v46
    %1286 = vmatprep.subr.mxu0 0.0
    %1287 = vmatpush2.msra.mxu0 0.0
    %1288 = vmatprep.subr.mxu0 0.0
    %1289 = vmatpush2.msra.mxu0 0.0
    %1290 = vmatprep.subr.mxu0 0.0
    %1291 = vmatpush2.msra.mxu0 0.0
    %1292 = vmatprep.subr.mxu0 0.0
    %1293 = vmatpush2.msra.mxu0 0.0
    %1294 = vmatprep.subr.mxu0 0.0
    %1295 = vmatpush2.msra.mxu0 0.0
    %1296 = vmatprep.subr.mxu0 0.0
    %1297 = vmatpush2.msra.mxu0 0.0
    %1298 = vmatprep.subr.mxu0 0.0
    %1299 = vmatpush2.msra.mxu0 0.0
    %1300 = vmatprep.subr.mxu0 0.0
    %1301 = vmatpush2.msra.mxu0 0.0
    %1302 = vmatprep.subr.mxu0 0.0
    %1303 = vmatpush2.msra.mxu0 0.0
    %1304 = vmatprep.subr.mxu0 0.0
    %1305 = vmatpush2.msra.mxu0 0.0
    %1306 = vmatprep.subr.mxu0 0.0
    %1307 = vmatpush2.msra.mxu0 0.0
    %1308 = vmatprep.subr.mxu0 0.0
    %1309 = vmatpush2.msra.mxu0 0.0
    %1310 = vmatprep.subr.mxu0 0.0
    %1311 = vmatpush2.msra.mxu0 0.0
    %1312 = vmatprep.subr.mxu0 0.0
    %1313 = vmatpush2.msra.mxu0 0.0
    %1314 = vmatprep.subr.mxu0 0.0
    %1315 = vmatpush2.msra.mxu0 0.0
    %1316 = vmatprep.subr.mxu0 0.0
    %1317 = vmatpush2.msra.mxu0 0.0
    %1318 = vmatprep.mubr.f32.mxu0 0.0
    %1319 = vmatmul.mubr.f32.gmra.mxu0 %v1252
    %v1320 = vpop.f32.mrf.mxu0
    %v1321 = vadd.f32 %v1245, %v1320
    %v1322 = vpop.f32.mrf.mxu0
    %1323 = vdwg.mxu0
    %v1324 = vadd.f32 %v1321, %v59
    %v1325 = vtanh.pop %v1324
    %v1326 = vmul.f32 %v1325, %v157
    %v1327 = vadd.f32 %v1326, %v158
    %v1328 = vmul.f32 %v1327, %v1069
    %1330 = vrot.lane.b32.xlu0 %v1327, 64
    %v1331 = vpop.permute.xlu0 %1330
    %v1333 = vmul.f32 %v1327, %v1331
    %1335 = vrot.lane.b32.xlu0 %v1333, 32
    %v1336 = vpop.permute.xlu0 %1335
    %v1338 = vadd.f32 %v1328, %v1336
    %v1339 = vtanh.pop %v1338
    %1341 = vrot.lane.b32.xlu0 %v1339, 64
    %v1342 = vpop.permute.xlu0 %1341
    %v1344 = vmul.f32 %v1327, %v1342
    %1345 = vmatprep.subr.mxu0 0.0
    %1346 = vmatpush1.msra.mxu0 0.0
    %1347 = vmatprep.subr.mxu0 0.0
    %1348 = vmatpush1.msra.mxu0 0.0
    %1349 = vmatprep.subr.mxu0 0.0
    %1350 = vmatpush1.msra.mxu0 0.0
    %1351 = vmatprep.subr.mxu0 0.0
    %1352 = vmatpush1.msra.mxu0 0.0
    %1353 = vmatprep.subr.mxu0 0.0
    %1354 = vmatpush1.msra.mxu0 0.0
    %1355 = vmatprep.subr.mxu0 0.0
    %1356 = vmatpush1.msra.mxu0 0.0
    %1357 = vmatprep.subr.mxu0 0.0
    %1358 = vmatpush1.msra.mxu0 0.0
    %1359 = vmatprep.subr.mxu0 0.0
    %1360 = vmatpush1.msra.mxu0 0.0
    %1361 = vmatprep.subr.mxu0 0.0
    %1362 = vmatpush1.msra.mxu0 0.0
    %1363 = vmatprep.subr.mxu0 0.0
    %1364 = vmatpush1.msra.mxu0 0.0
    %1365 = vmatprep.subr.mxu0 0.0
    %1366 = vmatpush1.msra.mxu0 0.0
    %1367 = vmatprep.subr.mxu0 0.0
    %1368 = vmatpush1.msra.mxu0 0.0
    %1369 = vmatprep.subr.mxu0 0.0
    %1370 = vmatpush1.msra.mxu0 %v45
    %1371 = vmatprep.subr.mxu0 0.0
    %1372 = vmatpush1.msra.mxu0 %v44
    %1373 = vmatprep.subr.mxu0 0.0
    %1374 = vmatpush1.msra.mxu0 %v43
    %1375 = vmatprep.subr.mxu0 0.0
    %1376 = vmatpush1.msra.mxu0 %v42
    %1377 = vmatprep.subr.mxu0 0.0
    %1378 = vmatpush2.msra.mxu0 0.0
    %1379 = vmatprep.subr.mxu0 0.0
    %1380 = vmatpush2.msra.mxu0 0.0
    %1381 = vmatprep.subr.mxu0 0.0
    %1382 = vmatpush2.msra.mxu0 0.0
    %1383 = vmatprep.subr.mxu0 0.0
    %1384 = vmatpush2.msra.mxu0 0.0
    %1385 = vmatprep.subr.mxu0 0.0
    %1386 = vmatpush2.msra.mxu0 0.0
    %1387 = vmatprep.subr.mxu0 0.0
    %1388 = vmatpush2.msra.mxu0 0.0
    %1389 = vmatprep.subr.mxu0 0.0
    %1390 = vmatpush2.msra.mxu0 0.0
    %1391 = vmatprep.subr.mxu0 0.0
    %1392 = vmatpush2.msra.mxu0 0.0
    %1393 = vmatprep.subr.mxu0 0.0
    %1394 = vmatpush2.msra.mxu0 0.0
    %1395 = vmatprep.subr.mxu0 0.0
    %1396 = vmatpush2.msra.mxu0 0.0
    %1397 = vmatprep.subr.mxu0 0.0
    %1398 = vmatpush2.msra.mxu0 0.0
    %1399 = vmatprep.subr.mxu0 0.0
    %1400 = vmatpush2.msra.mxu0 0.0
    %1401 = vmatprep.subr.mxu0 0.0
    %1402 = vmatpush2.msra.mxu0 0.0
    %1403 = vmatprep.subr.mxu0 0.0
    %1404 = vmatpush2.msra.mxu0 0.0
    %1405 = vmatprep.subr.mxu0 0.0
    %1406 = vmatpush2.msra.mxu0 0.0
    %1407 = vmatprep.subr.mxu0 0.0
    %1408 = vmatpush2.msra.mxu0 0.0
    %1409 = vmatprep.mubr.f32.mxu0 0.0
    %1410 = vmatmul.mubr.f32.gmra.mxu0 %v1252
    %v1411 = vpop.f32.mrf.mxu0
    %v1412 = vadd.f32 0.0, %v1411
    %v1413 = vpop.f32.mrf.mxu0
    %1414 = vdwg.mxu0
    %v1416 = vrot.slane %v1412, 3
    %v1418 = vadd.f32 %v149, %v1416
    %v1419 = vtanh.pop %v1418
    %v1420 = vmul.f32 %v1419, %v157
    %v1421 = vadd.f32 %v1420, %v158
    %v1423 = vrot.slane %v1166, 7
    %v1425 = vmul.f32 %v1421, %v1423
    %1427 = vrot.lane.b32.xlu0 %v1421, 64
    %v1428 = vpop.permute.xlu0 %1427
    %v1430 = vmul.f32 %v1421, %v1428
    %1432 = vrot.lane.b32.xlu0 %v1430, 32
    %v1433 = vpop.permute.xlu0 %1432
    %v1435 = vadd.f32 %v1425, %v1433
    %v1436 = vtanh.pop %v1435
    %1438 = vrot.lane.b32.xlu0 %v1436, 64
    %v1439 = vpop.permute.xlu0 %1438
    %v1441 = vmul.f32 %v1421, %v1439
    %1443 = vrot.lane.b32.xlu0 %v1344, 32
    %v1444 = vpop.permute.xlu0 %1443
    %v1445 = vsel %vm176, %v1444, 0
    %1447 = vmatprep.subr.mxu0 0.0
    %1448 = vmatpush1.msra.mxu0 0.0
    %1449 = vmatprep.subr.mxu0 0.0
    %1450 = vmatpush1.msra.mxu0 0.0
    %1451 = vmatprep.subr.mxu0 0.0
    %1452 = vmatpush1.msra.mxu0 0.0
    %1453 = vmatprep.subr.mxu0 0.0
    %1454 = vmatpush1.msra.mxu0 0.0
    %1455 = vmatprep.subr.mxu0 0.0
    %1456 = vmatpush1.msra.mxu0 0.0
    %1457 = vmatprep.subr.mxu0 0.0
    %1458 = vmatpush1.msra.mxu0 0.0
    %1459 = vmatprep.subr.mxu0 0.0
    %1460 = vmatpush1.msra.mxu0 0.0
    %1461 = vmatprep.subr.mxu0 0.0
    %1462 = vmatpush1.msra.mxu0 0.0
    %1463 = vmatprep.subr.mxu0 0.0
    %1464 = vmatpush1.msra.mxu0 0.0
    %1465 = vmatprep.subr.mxu0 0.0
    %1466 = vmatpush1.msra.mxu0 0.0
    %1467 = vmatprep.subr.mxu0 0.0
    %1468 = vmatpush1.msra.mxu0 0.0
    %1469 = vmatprep.subr.mxu0 0.0
    %1470 = vmatpush1.msra.mxu0 0.0
    %1471 = vmatprep.subr.mxu0 0.0
    %1472 = vmatpush1.msra.mxu0 %v53
    %1473 = vmatprep.subr.mxu0 0.0
    %1474 = vmatpush1.msra.mxu0 %v52
    %1475 = vmatprep.subr.mxu0 0.0
    %1476 = vmatpush1.msra.mxu0 %v51
    %1477 = vmatprep.subr.mxu0 0.0
    %1478 = vmatpush1.msra.mxu0 %v50
    %1479 = vmatprep.subr.mxu0 0.0
    %1480 = vmatpush2.msra.mxu0 0.0
    %1481 = vmatprep.subr.mxu0 0.0
    %1482 = vmatpush2.msra.mxu0 0.0
    %1483 = vmatprep.subr.mxu0 0.0
    %1484 = vmatpush2.msra.mxu0 0.0
    %1485 = vmatprep.subr.mxu0 0.0
    %1486 = vmatpush2.msra.mxu0 0.0
    %1487 = vmatprep.subr.mxu0 0.0
    %1488 = vmatpush2.msra.mxu0 0.0
    %1489 = vmatprep.subr.mxu0 0.0
    %1490 = vmatpush2.msra.mxu0 0.0
    %1491 = vmatprep.subr.mxu0 0.0
    %1492 = vmatpush2.msra.mxu0 0.0
    %1493 = vmatprep.subr.mxu0 0.0
    %1494 = vmatpush2.msra.mxu0 0.0
    %1495 = vmatprep.subr.mxu0 0.0
    %1496 = vmatpush2.msra.mxu0 0.0
    %1497 = vmatprep.subr.mxu0 0.0
    %1498 = vmatpush2.msra.mxu0 0.0
    %1499 = vmatprep.subr.mxu0 0.0
    %1500 = vmatpush2.msra.mxu0 0.0
    %1501 = vmatprep.subr.mxu0 0.0
    %1502 = vmatpush2.msra.mxu0 0.0
    %1503 = vmatprep.subr.mxu0 0.0
    %1504 = vmatpush2.msra.mxu0 0.0
    %1505 = vmatprep.subr.mxu0 0.0
    %1506 = vmatpush2.msra.mxu0 0.0
    %1507 = vmatprep.subr.mxu0 0.0
    %1508 = vmatpush2.msra.mxu0 0.0
    %1509 = vmatprep.subr.mxu0 0.0
    %1510 = vmatpush2.msra.mxu0 0.0
    %1511 = vmatprep.mubr.f32.mxu0 0.0
    %1512 = vmatmul.mubr.f32.gmra.mxu0 %v1445
    %v1513 = vpop.f32.mrf.mxu0
    %v1514 = vadd.f32 0.0, %v1513
    %v1515 = vpop.f32.mrf.mxu0
    %1516 = vdwg.mxu0
    %v1518 = vrot.slane %v1441, 5
    %1519 = vrot.lane.b32.xlu0 %v1518, 32
    %v1520 = vpop.permute.xlu0 %1519
    %v1521 = vsel %vm176, %v1520, 0
    %1523 = vmatprep.subr.mxu0 0.0
    %1524 = vmatpush1.msra.mxu0 0.0
    %1525 = vmatprep.subr.mxu0 0.0
    %1526 = vmatpush1.msra.mxu0 0.0
    %1527 = vmatprep.subr.mxu0 0.0
    %1528 = vmatpush1.msra.mxu0 0.0
    %1529 = vmatprep.subr.mxu0 0.0
    %1530 = vmatpush1.msra.mxu0 0.0
    %1531 = vmatprep.subr.mxu0 0.0
    %1532 = vmatpush1.msra.mxu0 0.0
    %1533 = vmatprep.subr.mxu0 0.0
    %1534 = vmatpush1.msra.mxu0 0.0
    %1535 = vmatprep.subr.mxu0 0.0
    %1536 = vmatpush1.msra.mxu0 0.0
    %1537 = vmatprep.subr.mxu0 0.0
    %1538 = vmatpush1.msra.mxu0 0.0
    %1539 = vmatprep.subr.mxu0 0.0
    %1540 = vmatpush1.msra.mxu0 0.0
    %1541 = vmatprep.subr.mxu0 0.0
    %1542 = vmatpush1.msra.mxu0 0.0
    %1543 = vmatprep.subr.mxu0 0.0
    %1544 = vmatpush1.msra.mxu0 0.0
    %1545 = vmatprep.subr.mxu0 0.0
    %1546 = vmatpush1.msra.mxu0 0.0
    %1547 = vmatprep.subr.mxu0 0.0
    %1548 = vmatpush1.msra.mxu0 %v49
    %1549 = vmatprep.subr.mxu0 0.0
    %1550 = vmatpush1.msra.mxu0 %v48
    %1551 = vmatprep.subr.mxu0 0.0
    %1552 = vmatpush1.msra.mxu0 %v47
    %1553 = vmatprep.subr.mxu0 0.0
    %1554 = vmatpush1.msra.mxu0 %v46
    %1555 = vmatprep.subr.mxu0 0.0
    %1556 = vmatpush2.msra.mxu0 0.0
    %1557 = vmatprep.subr.mxu0 0.0
    %1558 = vmatpush2.msra.mxu0 0.0
    %1559 = vmatprep.subr.mxu0 0.0
    %1560 = vmatpush2.msra.mxu0 0.0
    %1561 = vmatprep.subr.mxu0 0.0
    %1562 = vmatpush2.msra.mxu0 0.0
    %1563 = vmatprep.subr.mxu0 0.0
    %1564 = vmatpush2.msra.mxu0 0.0
    %1565 = vmatprep.subr.mxu0 0.0
    %1566 = vmatpush2.msra.mxu0 0.0
    %1567 = vmatprep.subr.mxu0 0.0
    %1568 = vmatpush2.msra.mxu0 0.0
    %1569 = vmatprep.subr.mxu0 0.0
    %1570 = vmatpush2.msra.mxu0 0.0
    %1571 = vmatprep.subr.mxu0 0.0
    %1572 = vmatpush2.msra.mxu0 0.0
    %1573 = vmatprep.subr.mxu0 0.0
    %1574 = vmatpush2.msra.mxu0 0.0
    %1575 = vmatprep.subr.mxu0 0.0
    %1576 = vmatpush2.msra.mxu0 0.0
    %1577 = vmatprep.subr.mxu0 0.0
    %1578 = vmatpush2.msra.mxu0 0.0
    %1579 = vmatprep.subr.mxu0 0.0
    %1580 = vmatpush2.msra.mxu0 0.0
    %1581 = vmatprep.subr.mxu0 0.0
    %1582 = vmatpush2.msra.mxu0 0.0
    %1583 = vmatprep.subr.mxu0 0.0
    %1584 = vmatpush2.msra.mxu0 0.0
    %1585 = vmatprep.subr.mxu0 0.0
    %1586 = vmatpush2.msra.mxu0 0.0
    %1587 = vmatprep.mubr.f32.mxu0 0.0
    %1588 = vmatmul.mubr.f32.gmra.mxu0 %v1521
    %v1589 = vpop.f32.mrf.mxu0
    %v1590 = vadd.f32 %v1514, %v1589
    %v1591 = vpop.f32.mrf.mxu0
    %1592 = vdwg.mxu0
    %v1593 = vadd.f32 %v1590, %v59
    %v1594 = vtanh.pop %v1593
    %v1595 = vmul.f32 %v1594, %v157
    %v1596 = vadd.f32 %v1595, %v158
    %v1597 = vmul.f32 %v1596, %v1338
    %1599 = vrot.lane.b32.xlu0 %v1596, 64
    %v1600 = vpop.permute.xlu0 %1599
    %v1602 = vmul.f32 %v1596, %v1600
    %1604 = vrot.lane.b32.xlu0 %v1602, 32
    %v1605 = vpop.permute.xlu0 %1604
    %v1607 = vadd.f32 %v1597, %v1605
    %v1608 = vtanh.pop %v1607
    %1610 = vrot.lane.b32.xlu0 %v1608, 64
    %v1611 = vpop.permute.xlu0 %1610
    %v1613 = vmul.f32 %v1596, %v1611
    %1614 = vmatprep.subr.mxu0 0.0
    %1615 = vmatpush1.msra.mxu0 0.0
    %1616 = vmatprep.subr.mxu0 0.0
    %1617 = vmatpush1.msra.mxu0 0.0
    %1618 = vmatprep.subr.mxu0 0.0
    %1619 = vmatpush1.msra.mxu0 0.0
    %1620 = vmatprep.subr.mxu0 0.0
    %1621 = vmatpush1.msra.mxu0 0.0
    %1622 = vmatprep.subr.mxu0 0.0
    %1623 = vmatpush1.msra.mxu0 0.0
    %1624 = vmatprep.subr.mxu0 0.0
    %1625 = vmatpush1.msra.mxu0 0.0
    %1626 = vmatprep.subr.mxu0 0.0
    %1627 = vmatpush1.msra.mxu0 0.0
    %1628 = vmatprep.subr.mxu0 0.0
    %1629 = vmatpush1.msra.mxu0 0.0
    %1630 = vmatprep.subr.mxu0 0.0
    %1631 = vmatpush1.msra.mxu0 0.0
    %1632 = vmatprep.subr.mxu0 0.0
    %1633 = vmatpush1.msra.mxu0 0.0
    %1634 = vmatprep.subr.mxu0 0.0
    %1635 = vmatpush1.msra.mxu0 0.0
    %1636 = vmatprep.subr.mxu0 0.0
    %1637 = vmatpush1.msra.mxu0 0.0
    %1638 = vmatprep.subr.mxu0 0.0
    %1639 = vmatpush1.msra.mxu0 %v45
    %1640 = vmatprep.subr.mxu0 0.0
    %1641 = vmatpush1.msra.mxu0 %v44
    %1642 = vmatprep.subr.mxu0 0.0
    %1643 = vmatpush1.msra.mxu0 %v43
    %1644 = vmatprep.subr.mxu0 0.0
    %1645 = vmatpush1.msra.mxu0 %v42
    %1646 = vmatprep.subr.mxu0 0.0
    %1647 = vmatpush2.msra.mxu0 0.0
    %1648 = vmatprep.subr.mxu0 0.0
    %1649 = vmatpush2.msra.mxu0 0.0
    %1650 = vmatprep.subr.mxu0 0.0
    %1651 = vmatpush2.msra.mxu0 0.0
    %1652 = vmatprep.subr.mxu0 0.0
    %1653 = vmatpush2.msra.mxu0 0.0
    %1654 = vmatprep.subr.mxu0 0.0
    %1655 = vmatpush2.msra.mxu0 0.0
    %1656 = vmatprep.subr.mxu0 0.0
    %1657 = vmatpush2.msra.mxu0 0.0
    %1658 = vmatprep.subr.mxu0 0.0
    %1659 = vmatpush2.msra.mxu0 0.0
    %1660 = vmatprep.subr.mxu0 0.0
    %1661 = vmatpush2.msra.mxu0 0.0
    %1662 = vmatprep.subr.mxu0 0.0
    %1663 = vmatpush2.msra.mxu0 0.0
    %1664 = vmatprep.subr.mxu0 0.0
    %1665 = vmatpush2.msra.mxu0 0.0
    %1666 = vmatprep.subr.mxu0 0.0
    %1667 = vmatpush2.msra.mxu0 0.0
    %1668 = vmatprep.subr.mxu0 0.0
    %1669 = vmatpush2.msra.mxu0 0.0
    %1670 = vmatprep.subr.mxu0 0.0
    %1671 = vmatpush2.msra.mxu0 0.0
    %1672 = vmatprep.subr.mxu0 0.0
    %1673 = vmatpush2.msra.mxu0 0.0
    %1674 = vmatprep.subr.mxu0 0.0
    %1675 = vmatpush2.msra.mxu0 0.0
    %1676 = vmatprep.subr.mxu0 0.0
    %1677 = vmatpush2.msra.mxu0 0.0
    %1678 = vmatprep.mubr.f32.mxu0 0.0
    %1679 = vmatmul.mubr.f32.gmra.mxu0 %v1521
    %v1680 = vpop.f32.mrf.mxu0
    %v1681 = vadd.f32 0.0, %v1680
    %v1682 = vpop.f32.mrf.mxu0
    %1683 = vdwg.mxu0
    %v1685 = vrot.slane %v1681, 2
    %v1687 = vadd.f32 %v149, %v1685
    %v1688 = vtanh.pop %v1687
    %v1689 = vmul.f32 %v1688, %v157
    %v1690 = vadd.f32 %v1689, %v158
    %v1692 = vrot.slane %v1435, 7
    %v1694 = vmul.f32 %v1690, %v1692
    %1696 = vrot.lane.b32.xlu0 %v1690, 64
    %v1697 = vpop.permute.xlu0 %1696
    %v1699 = vmul.f32 %v1690, %v1697
    %1701 = vrot.lane.b32.xlu0 %v1699, 32
    %v1702 = vpop.permute.xlu0 %1701
    %v1704 = vadd.f32 %v1694, %v1702
    %v1705 = vtanh.pop %v1704
    %1707 = vrot.lane.b32.xlu0 %v1705, 64
    %v1708 = vpop.permute.xlu0 %1707
    %v1710 = vmul.f32 %v1690, %v1708
    %1712 = vrot.lane.b32.xlu0 %v1613, 32
    %v1713 = vpop.permute.xlu0 %1712
    %v1714 = vsel %vm176, %v1713, 0
    %1716 = vmatprep.subr.mxu0 0.0
    %1717 = vmatpush1.msra.mxu0 0.0
    %1718 = vmatprep.subr.mxu0 0.0
    %1719 = vmatpush1.msra.mxu0 0.0
    %1720 = vmatprep.subr.mxu0 0.0
    %1721 = vmatpush1.msra.mxu0 0.0
    %1722 = vmatprep.subr.mxu0 0.0
    %1723 = vmatpush1.msra.mxu0 0.0
    %1724 = vmatprep.subr.mxu0 0.0
    %1725 = vmatpush1.msra.mxu0 0.0
    %1726 = vmatprep.subr.mxu0 0.0
    %1727 = vmatpush1.msra.mxu0 0.0
    %1728 = vmatprep.subr.mxu0 0.0
    %1729 = vmatpush1.msra.mxu0 0.0
    %1730 = vmatprep.subr.mxu0 0.0
    %1731 = vmatpush1.msra.mxu0 0.0
    %1732 = vmatprep.subr.mxu0 0.0
    %1733 = vmatpush1.msra.mxu0 0.0
    %1734 = vmatprep.subr.mxu0 0.0
    %1735 = vmatpush1.msra.mxu0 0.0
    %1736 = vmatprep.subr.mxu0 0.0
    %1737 = vmatpush1.msra.mxu0 0.0
    %1738 = vmatprep.subr.mxu0 0.0
    %1739 = vmatpush1.msra.mxu0 0.0
    %1740 = vmatprep.subr.mxu0 0.0
    %1741 = vmatpush1.msra.mxu0 %v53
    %1742 = vmatprep.subr.mxu0 0.0
    %1743 = vmatpush1.msra.mxu0 %v52
    %1744 = vmatprep.subr.mxu0 0.0
    %1745 = vmatpush1.msra.mxu0 %v51
    %1746 = vmatprep.subr.mxu0 0.0
    %1747 = vmatpush1.msra.mxu0 %v50
    %1748 = vmatprep.subr.mxu0 0.0
    %1749 = vmatpush2.msra.mxu0 0.0
    %1750 = vmatprep.subr.mxu0 0.0
    %1751 = vmatpush2.msra.mxu0 0.0
    %1752 = vmatprep.subr.mxu0 0.0
    %1753 = vmatpush2.msra.mxu0 0.0
    %1754 = vmatprep.subr.mxu0 0.0
    %1755 = vmatpush2.msra.mxu0 0.0
    %1756 = vmatprep.subr.mxu0 0.0
    %1757 = vmatpush2.msra.mxu0 0.0
    %1758 = vmatprep.subr.mxu0 0.0
    %1759 = vmatpush2.msra.mxu0 0.0
    %1760 = vmatprep.subr.mxu0 0.0
    %1761 = vmatpush2.msra.mxu0 0.0
    %1762 = vmatprep.subr.mxu0 0.0
    %1763 = vmatpush2.msra.mxu0 0.0
    %1764 = vmatprep.subr.mxu0 0.0
    %1765 = vmatpush2.msra.mxu0 0.0
    %1766 = vmatprep.subr.mxu0 0.0
    %1767 = vmatpush2.msra.mxu0 0.0
    %1768 = vmatprep.subr.mxu0 0.0
    %1769 = vmatpush2.msra.mxu0 0.0
    %1770 = vmatprep.subr.mxu0 0.0
    %1771 = vmatpush2.msra.mxu0 0.0
    %1772 = vmatprep.subr.mxu0 0.0
    %1773 = vmatpush2.msra.mxu0 0.0
    %1774 = vmatprep.subr.mxu0 0.0
    %1775 = vmatpush2.msra.mxu0 0.0
    %1776 = vmatprep.subr.mxu0 0.0
    %1777 = vmatpush2.msra.mxu0 0.0
    %1778 = vmatprep.subr.mxu0 0.0
    %1779 = vmatpush2.msra.mxu0 0.0
    %1780 = vmatprep.mubr.f32.mxu0 0.0
    %1781 = vmatmul.mubr.f32.gmra.mxu0 %v1714
    %v1782 = vpop.f32.mrf.mxu0
    %v1783 = vadd.f32 0.0, %v1782
    %v1784 = vpop.f32.mrf.mxu0
    %1785 = vdwg.mxu0
    %v1787 = vrot.slane %v1710, 6
    %1788 = vrot.lane.b32.xlu0 %v1787, 32
    %v1789 = vpop.permute.xlu0 %1788
    %v1790 = vsel %vm176, %v1789, 0
    %1792 = vmatprep.subr.mxu0 0.0
    %1793 = vmatpush1.msra.mxu0 0.0
    %1794 = vmatprep.subr.mxu0 0.0
    %1795 = vmatpush1.msra.mxu0 0.0
    %1796 = vmatprep.subr.mxu0 0.0
    %1797 = vmatpush1.msra.mxu0 0.0
    %1798 = vmatprep.subr.mxu0 0.0
    %1799 = vmatpush1.msra.mxu0 0.0
    %1800 = vmatprep.subr.mxu0 0.0
    %1801 = vmatpush1.msra.mxu0 0.0
    %1802 = vmatprep.subr.mxu0 0.0
    %1803 = vmatpush1.msra.mxu0 0.0
    %1804 = vmatprep.subr.mxu0 0.0
    %1805 = vmatpush1.msra.mxu0 0.0
    %1806 = vmatprep.subr.mxu0 0.0
    %1807 = vmatpush1.msra.mxu0 0.0
    %1808 = vmatprep.subr.mxu0 0.0
    %1809 = vmatpush1.msra.mxu0 0.0
    %1810 = vmatprep.subr.mxu0 0.0
    %1811 = vmatpush1.msra.mxu0 0.0
    %1812 = vmatprep.subr.mxu0 0.0
    %1813 = vmatpush1.msra.mxu0 0.0
    %1814 = vmatprep.subr.mxu0 0.0
    %1815 = vmatpush1.msra.mxu0 0.0
    %1816 = vmatprep.subr.mxu0 0.0
    %1817 = vmatpush1.msra.mxu0 %v49
    %1818 = vmatprep.subr.mxu0 0.0
    %1819 = vmatpush1.msra.mxu0 %v48
    %1820 = vmatprep.subr.mxu0 0.0
    %1821 = vmatpush1.msra.mxu0 %v47
    %1822 = vmatprep.subr.mxu0 0.0
    %1823 = vmatpush1.msra.mxu0 %v46
    %1824 = vmatprep.subr.mxu0 0.0
    %1825 = vmatpush2.msra.mxu0 0.0
    %1826 = vmatprep.subr.mxu0 0.0
    %1827 = vmatpush2.msra.mxu0 0.0
    %1828 = vmatprep.subr.mxu0 0.0
    %1829 = vmatpush2.msra.mxu0 0.0
    %1830 = vmatprep.subr.mxu0 0.0
    %1831 = vmatpush2.msra.mxu0 0.0
    %1832 = vmatprep.subr.mxu0 0.0
    %1833 = vmatpush2.msra.mxu0 0.0
    %1834 = vmatprep.subr.mxu0 0.0
    %1835 = vmatpush2.msra.mxu0 0.0
    %1836 = vmatprep.subr.mxu0 0.0
    %1837 = vmatpush2.msra.mxu0 0.0
    %1838 = vmatprep.subr.mxu0 0.0
    %1839 = vmatpush2.msra.mxu0 0.0
    %1840 = vmatprep.subr.mxu0 0.0
    %1841 = vmatpush2.msra.mxu0 0.0
    %1842 = vmatprep.subr.mxu0 0.0
    %1843 = vmatpush2.msra.mxu0 0.0
    %1844 = vmatprep.subr.mxu0 0.0
    %1845 = vmatpush2.msra.mxu0 0.0
    %1846 = vmatprep.subr.mxu0 0.0
    %1847 = vmatpush2.msra.mxu0 0.0
    %1848 = vmatprep.subr.mxu0 0.0
    %1849 = vmatpush2.msra.mxu0 0.0
    %1850 = vmatprep.subr.mxu0 0.0
    %1851 = vmatpush2.msra.mxu0 0.0
    %1852 = vmatprep.subr.mxu0 0.0
    %1853 = vmatpush2.msra.mxu0 0.0
    %1854 = vmatprep.subr.mxu0 0.0
    %1855 = vmatpush2.msra.mxu0 0.0
    %1856 = vmatprep.mubr.f32.mxu0 0.0
    %1857 = vmatmul.mubr.f32.gmra.mxu0 %v1790
    %v1858 = vpop.f32.mrf.mxu0
    %v1859 = vadd.f32 %v1783, %v1858
    %v1860 = vpop.f32.mrf.mxu0
    %1861 = vdwg.mxu0
    %v1862 = vadd.f32 %v1859, %v59
    %v1863 = vtanh.pop %v1862
    %v1864 = vmul.f32 %v1863, %v157
    %v1865 = vadd.f32 %v1864, %v158
    %v1866 = vmul.f32 %v1865, %v1607
    %1868 = vrot.lane.b32.xlu0 %v1865, 64
    %v1869 = vpop.permute.xlu0 %1868
    %v1871 = vmul.f32 %v1865, %v1869
    %1873 = vrot.lane.b32.xlu0 %v1871, 32
    %v1874 = vpop.permute.xlu0 %1873
    %v1876 = vadd.f32 %v1866, %v1874
    %v1877 = vtanh.pop %v1876
    %1879 = vrot.lane.b32.xlu0 %v1877, 64
    %v1880 = vpop.permute.xlu0 %1879
    %v1882 = vmul.f32 %v1865, %v1880
    %1883 = vmatprep.subr.mxu0 0.0
    %1884 = vmatpush1.msra.mxu0 0.0
    %1885 = vmatprep.subr.mxu0 0.0
    %1886 = vmatpush1.msra.mxu0 0.0
    %1887 = vmatprep.subr.mxu0 0.0
    %1888 = vmatpush1.msra.mxu0 0.0
    %1889 = vmatprep.subr.mxu0 0.0
    %1890 = vmatpush1.msra.mxu0 0.0
    %1891 = vmatprep.subr.mxu0 0.0
    %1892 = vmatpush1.msra.mxu0 0.0
    %1893 = vmatprep.subr.mxu0 0.0
    %1894 = vmatpush1.msra.mxu0 0.0
    %1895 = vmatprep.subr.mxu0 0.0
    %1896 = vmatpush1.msra.mxu0 0.0
    %1897 = vmatprep.subr.mxu0 0.0
    %1898 = vmatpush1.msra.mxu0 0.0
    %1899 = vmatprep.subr.mxu0 0.0
    %1900 = vmatpush1.msra.mxu0 0.0
    %1901 = vmatprep.subr.mxu0 0.0
    %1902 = vmatpush1.msra.mxu0 0.0
    %1903 = vmatprep.subr.mxu0 0.0
    %1904 = vmatpush1.msra.mxu0 0.0
    %1905 = vmatprep.subr.mxu0 0.0
    %1906 = vmatpush1.msra.mxu0 0.0
    %1907 = vmatprep.subr.mxu0 0.0
    %1908 = vmatpush1.msra.mxu0 %v45
    %1909 = vmatprep.subr.mxu0 0.0
    %1910 = vmatpush1.msra.mxu0 %v44
    %1911 = vmatprep.subr.mxu0 0.0
    %1912 = vmatpush1.msra.mxu0 %v43
    %1913 = vmatprep.subr.mxu0 0.0
    %1914 = vmatpush1.msra.mxu0 %v42
    %1915 = vmatprep.subr.mxu0 0.0
    %1916 = vmatpush2.msra.mxu0 0.0
    %1917 = vmatprep.subr.mxu0 0.0
    %1918 = vmatpush2.msra.mxu0 0.0
    %1919 = vmatprep.subr.mxu0 0.0
    %1920 = vmatpush2.msra.mxu0 0.0
    %1921 = vmatprep.subr.mxu0 0.0
    %1922 = vmatpush2.msra.mxu0 0.0
    %1923 = vmatprep.subr.mxu0 0.0
    %1924 = vmatpush2.msra.mxu0 0.0
    %1925 = vmatprep.subr.mxu0 0.0
    %1926 = vmatpush2.msra.mxu0 0.0
    %1927 = vmatprep.subr.mxu0 0.0
    %1928 = vmatpush2.msra.mxu0 0.0
    %1929 = vmatprep.subr.mxu0 0.0
    %1930 = vmatpush2.msra.mxu0 0.0
    %1931 = vmatprep.subr.mxu0 0.0
    %1932 = vmatpush2.msra.mxu0 0.0
    %1933 = vmatprep.subr.mxu0 0.0
    %1934 = vmatpush2.msra.mxu0 0.0
    %1935 = vmatprep.subr.mxu0 0.0
    %1936 = vmatpush2.msra.mxu0 0.0
    %1937 = vmatprep.subr.mxu0 0.0
    %1938 = vmatpush2.msra.mxu0 0.0
    %1939 = vmatprep.subr.mxu0 0.0
    %1940 = vmatpush2.msra.mxu0 0.0
    %1941 = vmatprep.subr.mxu0 0.0
    %1942 = vmatpush2.msra.mxu0 0.0
    %1943 = vmatprep.subr.mxu0 0.0
    %1944 = vmatpush2.msra.mxu0 0.0
    %1945 = vmatprep.subr.mxu0 0.0
    %1946 = vmatpush2.msra.mxu0 0.0
    %1947 = vmatprep.mubr.f32.mxu0 0.0
    %1948 = vmatmul.mubr.f32.gmra.mxu0 %v1790
    %v1949 = vpop.f32.mrf.mxu0
    %v1950 = vadd.f32 0.0, %v1949
    %v1951 = vpop.f32.mrf.mxu0
    %1952 = vdwg.mxu0
    %v1954 = vrot.slane %v1950, 1
    %v1956 = vadd.f32 %v149, %v1954
    %v1957 = vtanh.pop %v1956
    %v1958 = vmul.f32 %v1957, %v157
    %v1959 = vadd.f32 %v1958, %v158
    %v1961 = vrot.slane %v1704, 7
    %v1963 = vmul.f32 %v1959, %v1961
    %1965 = vrot.lane.b32.xlu0 %v1959, 64
    %v1966 = vpop.permute.xlu0 %1965
    %v1968 = vmul.f32 %v1959, %v1966
    %1970 = vrot.lane.b32.xlu0 %v1968, 32
    %v1971 = vpop.permute.xlu0 %1970
    %v1973 = vadd.f32 %v1963, %v1971
    %v1974 = vtanh.pop %v1973
    %1976 = vrot.lane.b32.xlu0 %v1974, 64
    %v1977 = vpop.permute.xlu0 %1976
    %v1979 = vmul.f32 %v1959, %v1977
    %1981 = vrot.lane.b32.xlu0 %v1882, 32
    %v1982 = vpop.permute.xlu0 %1981
    %v1983 = vsel %vm176, %v1982, 0
    %1985 = vmatprep.subr.mxu0 0.0
    %1986 = vmatpush1.msra.mxu0 0.0
    %1987 = vmatprep.subr.mxu0 0.0
    %1988 = vmatpush1.msra.mxu0 0.0
    %1989 = vmatprep.subr.mxu0 0.0
    %1990 = vmatpush1.msra.mxu0 0.0
    %1991 = vmatprep.subr.mxu0 0.0
    %1992 = vmatpush1.msra.mxu0 0.0
    %1993 = vmatprep.subr.mxu0 0.0
    %1994 = vmatpush1.msra.mxu0 0.0
    %1995 = vmatprep.subr.mxu0 0.0
    %1996 = vmatpush1.msra.mxu0 0.0
    %1997 = vmatprep.subr.mxu0 0.0
    %1998 = vmatpush1.msra.mxu0 0.0
    %1999 = vmatprep.subr.mxu0 0.0
    %2000 = vmatpush1.msra.mxu0 0.0
    %2001 = vmatprep.subr.mxu0 0.0
    %2002 = vmatpush1.msra.mxu0 0.0
    %2003 = vmatprep.subr.mxu0 0.0
    %2004 = vmatpush1.msra.mxu0 0.0
    %2005 = vmatprep.subr.mxu0 0.0
    %2006 = vmatpush1.msra.mxu0 0.0
    %2007 = vmatprep.subr.mxu0 0.0
    %2008 = vmatpush1.msra.mxu0 0.0
    %2009 = vmatprep.subr.mxu0 0.0
    %2010 = vmatpush1.msra.mxu0 %v53
    %2011 = vmatprep.subr.mxu0 0.0
    %2012 = vmatpush1.msra.mxu0 %v52
    %2013 = vmatprep.subr.mxu0 0.0
    %2014 = vmatpush1.msra.mxu0 %v51
    %2015 = vmatprep.subr.mxu0 0.0
    %2016 = vmatpush1.msra.mxu0 %v50
    %2017 = vmatprep.subr.mxu0 0.0
    %2018 = vmatpush2.msra.mxu0 0.0
    %2019 = vmatprep.subr.mxu0 0.0
    %2020 = vmatpush2.msra.mxu0 0.0
    %2021 = vmatprep.subr.mxu0 0.0
    %2022 = vmatpush2.msra.mxu0 0.0
    %2023 = vmatprep.subr.mxu0 0.0
    %2024 = vmatpush2.msra.mxu0 0.0
    %2025 = vmatprep.subr.mxu0 0.0
    %2026 = vmatpush2.msra.mxu0 0.0
    %2027 = vmatprep.subr.mxu0 0.0
    %2028 = vmatpush2.msra.mxu0 0.0
    %2029 = vmatprep.subr.mxu0 0.0
    %2030 = vmatpush2.msra.mxu0 0.0
    %2031 = vmatprep.subr.mxu0 0.0
    %2032 = vmatpush2.msra.mxu0 0.0
    %2033 = vmatprep.subr.mxu0 0.0
    %2034 = vmatpush2.msra.mxu0 0.0
    %2035 = vmatprep.subr.mxu0 0.0
    %2036 = vmatpush2.msra.mxu0 0.0
    %2037 = vmatprep.subr.mxu0 0.0
    %2038 = vmatpush2.msra.mxu0 0.0
    %2039 = vmatprep.subr.mxu0 0.0
    %2040 = vmatpush2.msra.mxu0 0.0
    %2041 = vmatprep.subr.mxu0 0.0
    %2042 = vmatpush2.msra.mxu0 0.0
    %2043 = vmatprep.subr.mxu0 0.0
    %2044 = vmatpush2.msra.mxu0 0.0
    %2045 = vmatprep.subr.mxu0 0.0
    %2046 = vmatpush2.msra.mxu0 0.0
    %2047 = vmatprep.subr.mxu0 0.0
    %2048 = vmatpush2.msra.mxu0 0.0
    %2049 = vmatprep.mubr.f32.mxu0 0.0
    %2050 = vmatmul.mubr.f32.gmra.mxu0 %v1983
    %v2051 = vpop.f32.mrf.mxu0
    %v2052 = vadd.f32 0.0, %v2051
    %v2053 = vpop.f32.mrf.mxu0
    %2054 = vdwg.mxu0
    %v2056 = vrot.slane %v1979, 7
    %2057 = vrot.lane.b32.xlu0 %v2056, 32
    %v2058 = vpop.permute.xlu0 %2057
    %v2059 = vsel %vm176, %v2058, 0
    %2061 = vmatprep.subr.mxu0 0.0
    %2062 = vmatpush1.msra.mxu0 0.0
    %2063 = vmatprep.subr.mxu0 0.0
    %2064 = vmatpush1.msra.mxu0 0.0
    %2065 = vmatprep.subr.mxu0 0.0
    %2066 = vmatpush1.msra.mxu0 0.0
    %2067 = vmatprep.subr.mxu0 0.0
    %2068 = vmatpush1.msra.mxu0 0.0
    %2069 = vmatprep.subr.mxu0 0.0
    %2070 = vmatpush1.msra.mxu0 0.0
    %2071 = vmatprep.subr.mxu0 0.0
    %2072 = vmatpush1.msra.mxu0 0.0
    %2073 = vmatprep.subr.mxu0 0.0
    %2074 = vmatpush1.msra.mxu0 0.0
    %2075 = vmatprep.subr.mxu0 0.0
    %2076 = vmatpush1.msra.mxu0 0.0
    %2077 = vmatprep.subr.mxu0 0.0
    %2078 = vmatpush1.msra.mxu0 0.0
    %2079 = vmatprep.subr.mxu0 0.0
    %2080 = vmatpush1.msra.mxu0 0.0
    %2081 = vmatprep.subr.mxu0 0.0
    %2082 = vmatpush1.msra.mxu0 0.0
    %2083 = vmatprep.subr.mxu0 0.0
    %2084 = vmatpush1.msra.mxu0 0.0
    %2085 = vmatprep.subr.mxu0 0.0
    %2086 = vmatpush1.msra.mxu0 %v49
    %2087 = vmatprep.subr.mxu0 0.0
    %2088 = vmatpush1.msra.mxu0 %v48
    %2089 = vmatprep.subr.mxu0 0.0
    %2090 = vmatpush1.msra.mxu0 %v47
    %2091 = vmatprep.subr.mxu0 0.0
    %2092 = vmatpush1.msra.mxu0 %v46
    %2093 = vmatprep.subr.mxu0 0.0
    %2094 = vmatpush2.msra.mxu0 0.0
    %2095 = vmatprep.subr.mxu0 0.0
    %2096 = vmatpush2.msra.mxu0 0.0
    %2097 = vmatprep.subr.mxu0 0.0
    %2098 = vmatpush2.msra.mxu0 0.0
    %2099 = vmatprep.subr.mxu0 0.0
    %2100 = vmatpush2.msra.mxu0 0.0
    %2101 = vmatprep.subr.mxu0 0.0
    %2102 = vmatpush2.msra.mxu0 0.0
    %2103 = vmatprep.subr.mxu0 0.0
    %2104 = vmatpush2.msra.mxu0 0.0
    %2105 = vmatprep.subr.mxu0 0.0
    %2106 = vmatpush2.msra.mxu0 0.0
    %2107 = vmatprep.subr.mxu0 0.0
    %2108 = vmatpush2.msra.mxu0 0.0
    %2109 = vmatprep.subr.mxu0 0.0
    %2110 = vmatpush2.msra.mxu0 0.0
    %2111 = vmatprep.subr.mxu0 0.0
    %2112 = vmatpush2.msra.mxu0 0.0
    %2113 = vmatprep.subr.mxu0 0.0
    %2114 = vmatpush2.msra.mxu0 0.0
    %2115 = vmatprep.subr.mxu0 0.0
    %2116 = vmatpush2.msra.mxu0 0.0
    %2117 = vmatprep.subr.mxu0 0.0
    %2118 = vmatpush2.msra.mxu0 0.0
    %2119 = vmatprep.subr.mxu0 0.0
    %2120 = vmatpush2.msra.mxu0 0.0
    %2121 = vmatprep.subr.mxu0 0.0
    %2122 = vmatpush2.msra.mxu0 0.0
    %2123 = vmatprep.subr.mxu0 0.0
    %2124 = vmatpush2.msra.mxu0 0.0
    %2125 = vmatprep.mubr.f32.mxu0 0.0
    %2126 = vmatmul.mubr.f32.gmra.mxu0 %v2059
    %v2127 = vpop.f32.mrf.mxu0
    %v2128 = vadd.f32 %v2052, %v2127
    %v2129 = vpop.f32.mrf.mxu0
    %2130 = vdwg.mxu0
    %v2131 = vadd.f32 %v2128, %v59
    %v2132 = vtanh.pop %v2131
    %v2133 = vmul.f32 %v2132, %v157
    %v2134 = vadd.f32 %v2133, %v158
    %v2135 = vmul.f32 %v2134, %v1876
    %2137 = vrot.lane.b32.xlu0 %v2134, 64
    %v2138 = vpop.permute.xlu0 %2137
    %v2140 = vmul.f32 %v2134, %v2138
    %2142 = vrot.lane.b32.xlu0 %v2140, 32
    %v2143 = vpop.permute.xlu0 %2142
    %v2145 = vadd.f32 %v2135, %v2143
    %v2146 = vtanh.pop %v2145
    %2148 = vrot.lane.b32.xlu0 %v2146, 64
    %v2149 = vpop.permute.xlu0 %2148
    %v2151 = vmul.f32 %v2134, %v2149
    %2153 = vrot.lane.b32.xlu0 %v2151, 32
    %v2154 = vpop.permute.xlu0 %2153
    %v2155 = vsel %vm176, %v2154, 0
    %2157 = vmatprep.subr.mxu0 0.0
    %2158 = vmatpush1.msra.mxu0 0.0
    %2159 = vmatprep.subr.mxu0 0.0
    %2160 = vmatpush1.msra.mxu0 0.0
    %2161 = vmatprep.subr.mxu0 0.0
    %2162 = vmatpush1.msra.mxu0 0.0
    %2163 = vmatprep.subr.mxu0 0.0
    %2164 = vmatpush1.msra.mxu0 0.0
    %2165 = vmatprep.subr.mxu0 0.0
    %2166 = vmatpush1.msra.mxu0 0.0
    %2167 = vmatprep.subr.mxu0 0.0
    %2168 = vmatpush1.msra.mxu0 0.0
    %2169 = vmatprep.subr.mxu0 0.0
    %2170 = vmatpush1.msra.mxu0 0.0
    %2171 = vmatprep.subr.mxu0 0.0
    %2172 = vmatpush1.msra.mxu0 0.0
    %2173 = vmatprep.subr.mxu0 0.0
    %2174 = vmatpush1.msra.mxu0 0.0
    %2175 = vmatprep.subr.mxu0 0.0
    %2176 = vmatpush1.msra.mxu0 0.0
    %2177 = vmatprep.subr.mxu0 0.0
    %2178 = vmatpush1.msra.mxu0 0.0
    %2179 = vmatprep.subr.mxu0 0.0
    %2180 = vmatpush1.msra.mxu0 0.0
    %2181 = vmatprep.subr.mxu0 0.0
    %2182 = vmatpush1.msra.mxu0 %v57
    %2183 = vmatprep.subr.mxu0 0.0
    %2184 = vmatpush1.msra.mxu0 %v56
    %2185 = vmatprep.subr.mxu0 0.0
    %2186 = vmatpush1.msra.mxu0 %v55
    %2187 = vmatprep.subr.mxu0 0.0
    %2188 = vmatpush1.msra.mxu0 %v54
    %2189 = vmatprep.subr.mxu0 0.0
    %2190 = vmatpush2.msra.mxu0 0.0
    %2191 = vmatprep.subr.mxu0 0.0
    %2192 = vmatpush2.msra.mxu0 0.0
    %2193 = vmatprep.subr.mxu0 0.0
    %2194 = vmatpush2.msra.mxu0 0.0
    %2195 = vmatprep.subr.mxu0 0.0
    %2196 = vmatpush2.msra.mxu0 0.0
    %2197 = vmatprep.subr.mxu0 0.0
    %2198 = vmatpush2.msra.mxu0 0.0
    %2199 = vmatprep.subr.mxu0 0.0
    %2200 = vmatpush2.msra.mxu0 0.0
    %2201 = vmatprep.subr.mxu0 0.0
    %2202 = vmatpush2.msra.mxu0 0.0
    %2203 = vmatprep.subr.mxu0 0.0
    %2204 = vmatpush2.msra.mxu0 0.0
    %2205 = vmatprep.subr.mxu0 0.0
    %2206 = vmatpush2.msra.mxu0 0.0
    %2207 = vmatprep.subr.mxu0 0.0
    %2208 = vmatpush2.msra.mxu0 0.0
    %2209 = vmatprep.subr.mxu0 0.0
    %2210 = vmatpush2.msra.mxu0 0.0
    %2211 = vmatprep.subr.mxu0 0.0
    %2212 = vmatpush2.msra.mxu0 0.0
    %2213 = vmatprep.subr.mxu0 0.0
    %2214 = vmatpush2.msra.mxu0 0.0
    %2215 = vmatprep.subr.mxu0 0.0
    %2216 = vmatpush2.msra.mxu0 0.0
    %2217 = vmatprep.subr.mxu0 0.0
    %2218 = vmatpush2.msra.mxu0 0.0
    %2219 = vmatprep.subr.mxu0 0.0
    %2220 = vmatpush2.msra.mxu0 0.0
    %2221 = vmatprep.mubr.f32.mxu0 0.0
    %2222 = vmatmul.mubr.f32.gmra.mxu0 %v2155
    %v2223 = vpop.f32.mrf.mxu0
    %v2224 = vadd.f32 %v60, %v2223
    %v2225 = vpop.f32.mrf.mxu0
    %2226 = vdwg.mxu0
    %2227 = vst [vmem:[%s3] sm:$0x1] %v2224
    // Predicated region
    $region22: #{_forward_jit.1} parent=1 // pred_check
      _
    $region23: #{_forward_jit.1} parent=1 // pred_check_branch
      %2229 = sbr.rel (0) target = $region25
    $region24: #{_forward_jit.1} parent=1 // pred_region
      _
    $region25: #{_forward_jit.1} parent=1 // pred_fallthru
      _
    // Predicated region
    $region26: #{_forward_jit.1} parent=1 // pred_check
      _
    $region27: #{_forward_jit.1} parent=1 // pred_check_branch
      %2231 = sbr.rel (0) target = $region29
    $region28: #{_forward_jit.1} parent=1 // pred_region
      _
    $region29: #{_forward_jit.1} parent=1 // pred_fallthru
      _
    %2232 = vsyncpa [#allocation3], 1
    %2233 = vsyncpa [#allocation5], 1

</llo_original>
